<compile_context>
chip_gen: v5e
topology: v5e:2x2
jax: 0.10.0
libtpu: 0.0.40
codegen_flags: <defaults>
</compile_context>

<pallas_src>
import functools
import math

import jax
import jax.numpy as jnp
import numpy as np
from jax.experimental import pallas as pl
from jax.experimental.pallas import tpu as pltpu

MATMUL_DTYPE = jnp.bfloat16   # MXU operand dtype; elementwise math stays float32


# ----------------------------------------------------------------------------
# Shared helper (used by both the kernel and the f32 reference)
# ----------------------------------------------------------------------------

def _layer_norm(x, gamma, beta, eps=1e-5):
    mu = jnp.mean(x, axis=-1, keepdims=True)
    var = jnp.mean((x - mu) ** 2, axis=-1, keepdims=True)
    return (x - mu) * jax.lax.rsqrt(var + eps) * gamma + beta


# ----------------------------------------------------------------------------
# Fused forward kernel
# ----------------------------------------------------------------------------

def fused_forward_kernel(x_ref, wa_ref, w2_ref, vec_ref, o_ref, *,
                         n_heads_list, ff_dim):
    B, S, D = x_ref.shape
    F = ff_dim
    L = len(n_heads_list)
    BS = B * S

    # Static row layout of the f32 vector slab.
    LYR0 = S                       # rows [0:S] hold the positional-encoding table
    REGW = S + 8 * L               # regressor weight row (1/S already folded in)
    REGB = REGW + 1                # regressor bias row (column 0)

    # Positional encoding add, then flatten batch+seq into one slab for matmuls.
    pe = vec_ref[0:S, :D]                                       # (S, D) f32
    h = (x_ref[...] + pe[None, :, :]).reshape(BS, D)            # (BS, D) f32

    for li, nh in enumerate(n_heads_list):        # static unroll over layers
        hd = D // nh
        r0 = LYR0 + 8 * li

        # ---- packed parameters for this layer (static slices; bf16 weights) ----
        wqkv = wa_ref[li, :, 0:3 * D]                           # (D, 3D)  (q cols pre-scaled)
        wo   = wa_ref[li, :, 3 * D:4 * D]                       # (D, D)
        w1   = wa_ref[li, :, 4 * D:4 * D + F]                   # (D, F)
        w2   = w2_ref[li]                                       # (F, D)
        bqkv = vec_ref[r0 + 0:r0 + 1, :3 * D]                   # (1, 3D) f32
        bo   = vec_ref[r0 + 1:r0 + 2, :D]
        g1   = vec_ref[r0 + 2:r0 + 3, :D]
        be1  = vec_ref[r0 + 3:r0 + 4, :D]
        b1   = vec_ref[r0 + 4:r0 + 5, :F]
        b2   = vec_ref[r0 + 5:r0 + 6, :D]
        g2   = vec_ref[r0 + 6:r0 + 7, :D]
        be2  = vec_ref[r0 + 7:r0 + 8, :D]

        # ---- fused Q/K/V projection: one MXU matmul on the whole (BS, D) slab ----
        h_bf = h.astype(MATMUL_DTYPE)
        qkv = jnp.dot(h_bf, wqkv, preferred_element_type=jnp.float32) + bqkv
        q = qkv[:, 0:D].astype(MATMUL_DTYPE)       # 1/sqrt(hd) folded into wqkv/bqkv
        k = qkv[:, D:2 * D].astype(MATMUL_DTYPE)
        v = qkv[:, 2 * D:3 * D].astype(MATMUL_DTYPE)

        # ---- multi-head self-attention; head outputs stay in vregs ----
        head_outs = []
        for hh in range(nh):                        # static unroll over heads (<= 4)
            lo = hh * hd
            qh = q[:, lo:lo + hd].reshape(B, S, hd)
            kh = k[:, lo:lo + hd].reshape(B, S, hd)
            vh = v[:, lo:lo + hd].reshape(B, S, hd)

            s = jnp.einsum('bqh,bkh->bqk', qh, kh,
                           preferred_element_type=jnp.float32)
            s = s - jnp.max(s, axis=-1, keepdims=True)
            p = jnp.exp(s)
            p = p * pl.reciprocal(jnp.sum(p, axis=-1, keepdims=True), approx=True)

            oh = jnp.einsum('bqk,bkh->bqh', p.astype(MATMUL_DTYPE), vh,
                            preferred_element_type=jnp.float32)
            head_outs.append(oh.reshape(BS, hd))

        attn = head_outs[0] if nh == 1 else jnp.concatenate(head_outs, axis=-1)
        attn = jnp.dot(attn.astype(MATMUL_DTYPE), wo,
                       preferred_element_type=jnp.float32) + bo

        # ---- residual + LayerNorm 1 (f32 elementwise) ----
        h1 = _layer_norm(h + attn, g1, be1)

        # ---- ReLU feed-forward (ff intermediate is lane-dense: F = 128) ----
        f = jnp.dot(h1.astype(MATMUL_DTYPE), w1,
                    preferred_element_type=jnp.float32) + b1
        f = jnp.maximum(f, 0.0)
        f = jnp.dot(f.astype(MATMUL_DTYPE), w2,
                    preferred_element_type=jnp.float32) + b2

        # ---- residual + LayerNorm 2 ----
        h = _layer_norm(h1 + f, g2, be2)

    # Mean-pool over the sequence axis (1/S folded into reg_w) + Linear(D, 1),
    # done on the VPU/XLU: multiply + lane reduction (no N=1 MXU pass).
    pooled = jnp.sum(h.reshape(B, S, D), axis=1)                # (B, D)
    reg_w = vec_ref[REGW:REGW + 1, :D]                          # (1, D)
    reg_b = vec_ref[REGB:REGB + 1, 0:1]                         # (1, 1)
    o_ref[...] = jnp.sum(pooled * reg_w, axis=-1, keepdims=True) + reg_b


# ----------------------------------------------------------------------------
# Wrapper
# ----------------------------------------------------------------------------

def make_forward_fn(B, n_heads_list, ff_dim):
    kernel = functools.partial(fused_forward_kernel,
                               n_heads_list=tuple(n_heads_list), ff_dim=ff_dim)
    fused = pl.pallas_call(
        kernel,
        out_shape=jax.ShapeDtypeStruct((B, 1), jnp.float32),
        in_specs=[pl.BlockSpec(memory_space=pltpu.MemorySpace.VMEM)] * 4,
        out_specs=pl.BlockSpec(memory_space=pltpu.MemorySpace.VMEM),
    )

    @jax.jit
    def forward(x, wa, w2, vecs):
        return fused(x, wa, w2, vecs)

    return forward


# ----------------------------------------------------------------------------
# Host-side parameter construction / packing (built once)
# ----------------------------------------------------------------------------

def sinusoidal_pe(seq_len, d_model):
    pos = np.arange(seq_len, dtype=np.float32)[:, None]
    i = np.arange(0, d_model, 2, dtype=np.float32)[None, :]
    angle = pos / np.power(10000.0, i / d_model)
    pe = np.zeros((seq_len, d_model), np.float32)
    pe[:, 0::2] = np.sin(angle)
    pe[:, 1::2] = np.cos(angle)
    return jnp.asarray(pe)


def init_params(key, input_size, head_sizes, ff_dim):
    """Full-precision (f32) parameters, kept for the pure-JAX reference."""
    D = input_size
    n_heads_list = tuple(h for block in head_sizes for h in block)
    for nh in n_heads_list:
        assert D % nh == 0, "d_model must be divisible by every head count"
    assert D % 2 == 0, "d_model must be even for sinusoidal PE"

    def dense(k, fi, fo):
        return jax.random.normal(k, (fi, fo), jnp.float32) / math.sqrt(fi)

    def vec(k, n, scale=0.02):
        return scale * jax.random.normal(k, (n,), jnp.float32)

    layers = []
    for _ in n_heads_list:
        key, *ks = jax.random.split(key, 17)
        layers.append(dict(
            wq=dense(ks[0], D, D),   bq=vec(ks[1], D),
            wk=dense(ks[2], D, D),   bk=vec(ks[3], D),
            wv=dense(ks[4], D, D),   bv=vec(ks[5], D),
            wo=dense(ks[6], D, D),   bo=vec(ks[7], D),
            g1=1.0 + vec(ks[8], D),  be1=vec(ks[9], D),
            w1=dense(ks[10], D, ff_dim), b1=vec(ks[11], ff_dim),
            w2=dense(ks[12], ff_dim, D), b2=vec(ks[13], D),
            g2=1.0 + vec(ks[14], D), be2=vec(ks[15], D),
        ))

    key, kw, kb = jax.random.split(key, 3)
    reg_w = dense(kw, D, 1)
    reg_b = vec(kb, 1)
    return dict(layers=tuple(layers), n_heads=n_heads_list,
                reg_w=reg_w, reg_b=reg_b)


def pack_params(pe, layers, n_heads_list, reg_w, reg_b, S, D, F):
    """Pack all parameters into 3 contiguous arrays (few prologue DMAs)."""
    L = len(layers)
    W = max(3 * D, F, D)           # lane width of the f32 vector slab

    wa = np.zeros((L, D, 4 * D + F), np.float32)        # [wqkv | wo | w1]
    w2 = np.zeros((L, F, D), np.float32)
    vecs = np.zeros((S + 8 * L + 2, W), np.float32)

    vecs[0:S, :D] = np.asarray(pe, np.float32)

    for li, (layer, nh) in enumerate(zip(layers, n_heads_list)):
        hd = D // nh
        scale = 1.0 / math.sqrt(hd)                       # fold 1/sqrt(hd) into Q
        wqkv = np.concatenate([np.asarray(layer['wq']) * scale,
                               np.asarray(layer['wk']),
                               np.asarray(layer['wv'])], axis=1)          # (D, 3D)
        bqkv = np.concatenate([np.asarray(layer['bq']) * scale,
                               np.asarray(layer['bk']),
                               np.asarray(layer['bv'])], axis=0)          # (3D,)
        wa[li, :, 0:3 * D] = wqkv
        wa[li, :, 3 * D:4 * D] = np.asarray(layer['wo'])
        wa[li, :, 4 * D:4 * D + F] = np.asarray(layer['w1'])
        w2[li] = np.asarray(layer['w2'])

        r0 = S + 8 * li
        vecs[r0 + 0, :3 * D] = bqkv
        vecs[r0 + 1, :D] = np.asarray(layer['bo'])
        vecs[r0 + 2, :D] = np.asarray(layer['g1'])
        vecs[r0 + 3, :D] = np.asarray(layer['be1'])
        vecs[r0 + 4, :F] = np.asarray(layer['b1'])
        vecs[r0 + 5, :D] = np.asarray(layer['b2'])
        vecs[r0 + 6, :D] = np.asarray(layer['g2'])
        vecs[r0 + 7, :D] = np.asarray(layer['be2'])

    vecs[S + 8 * L, :D] = np.asarray(reg_w)[:, 0] / float(S)   # fold 1/S mean scale
    vecs[S + 8 * L + 1, 0] = float(np.asarray(reg_b)[0])

    return (jnp.asarray(wa, MATMUL_DTYPE),
            jnp.asarray(w2, MATMUL_DTYPE),
            jnp.asarray(vecs, jnp.float32))


# ----------------------------------------------------------------------------
# Pure-JAX f32 reference (un-quantized weights) for correctness checking
# ----------------------------------------------------------------------------

def reference_forward(x, pe, layers, n_heads_list, reg_w, reg_b):
    B, S, D = x.shape
    h = x + pe[None]
    for layer, nh in zip(layers, n_heads_list):
        hd = D // nh
        q = h @ layer['wq'] + layer['bq']
        k = h @ layer['wk'] + layer['bk']
        v = h @ layer['wv'] + layer['bv']
        qh = q.reshape(B, S, nh, hd)
        kh = k.reshape(B, S, nh, hd)
        vh = v.reshape(B, S, nh, hd)
        s = jnp.einsum('bqnh,bknh->bnqk', qh, kh) / math.sqrt(hd)
        p = jax.nn.softmax(s, axis=-1)
        attn = jnp.einsum('bnqk,bknh->bqnh', p, vh).reshape(B, S, D)
        attn = attn @ layer['wo'] + layer['bo']
        h1 = _layer_norm(h + attn, layer['g1'], layer['be1'])
        f = jnp.maximum(h1 @ layer['w1'] + layer['b1'], 0.0)
        f = f @ layer['w2'] + layer['b2']
        h = _layer_norm(h1 + f, layer['g2'], layer['be2'])
    pooled = h.mean(axis=-2)
    return pooled @ reg_w + reg_b


# ----------------------------------------------------------------------------
# Main
# ----------------------------------------------------------------------------

if __name__ == "__main__":
    B, S, D = 2, 8, 32                 # batch, sequence length, input_size
    head_sizes = [[4], [2]]            # two encoder blocks: 4 heads, then 2 heads
    ff_dim = 4 * D

    key = jax.random.PRNGKey(0)
    kx, kp = jax.random.split(key)
    x = jax.random.normal(kx, (B, S, D), jnp.float32)
    params = init_params(kp, D, head_sizes, ff_dim)
    pe = sinusoidal_pe(S, D)

    wa, w2s, vecs = pack_params(pe, params['layers'], params['n_heads'],
                                params['reg_w'], params['reg_b'], S, D, ff_dim)

    forward = make_forward_fn(B, params['n_heads'], ff_dim)
    out = jax.block_until_ready(forward(x, wa, w2s, vecs))
    assert out.shape == (B, 1) and out.dtype == jnp.float32

    ref = reference_forward(x, pe, params['layers'], params['n_heads'],
                            params['reg_w'], params['reg_b'])
    np.testing.assert_allclose(np.asarray(out), np.asarray(ref),
                               rtol=1e-1, atol=1e-1)

    print("KERNEL_OK")
</pallas_src>

<mosaic_0001>
module attributes {stable_mosaic.version = 11 : i64} {
  func.func @fused_forward_kernel(%arg0: memref<2x8x32xf32, #tpu.memory_space<vmem>>, %arg1: memref<2x32x256xbf16, #tpu.memory_space<vmem>>, %arg2: memref<2x128x32xbf16, #tpu.memory_space<vmem>>, %arg3: memref<26x128xf32, #tpu.memory_space<vmem>>, %arg4: memref<2x1xf32, #tpu.memory_space<vmem>>) attributes {dimension_semantics = [], scalar_prefetch = 0 : i64, scratch_operands = 0 : i64, tpu.core_type = #tpu.core_type<tc>} {
    %c0 = arith.constant 0 : index
    %c0_0 = arith.constant 0 : index
    %0 = vector.load %arg3[%c0, %c0_0] : memref<26x128xf32, #tpu.memory_space<vmem>>, vector<8x32xf32>
    %c0_1 = arith.constant 0 : index
    %c0_2 = arith.constant 0 : index
    %c0_3 = arith.constant 0 : index
    %1 = vector.load %arg0[%c0_1, %c0_2, %c0_3] : memref<2x8x32xf32, #tpu.memory_space<vmem>>, vector<2x8x32xf32>
    %2 = vector.shape_cast %0 : vector<8x32xf32> to vector<1x8x32xf32>
    %3 = vector.broadcast %2 : vector<1x8x32xf32> to vector<2x8x32xf32>
    %4 = arith.addf %1, %3 : vector<2x8x32xf32>
    %5 = vector.shape_cast %4 : vector<2x8x32xf32> to vector<16x32xf32>
    %c0_4 = arith.constant 0 : index
    %c0_5 = arith.constant 0 : index
    %c0_6 = arith.constant 0 : index
    %6 = vector.load %arg1[%c0_4, %c0_5, %c0_6] : memref<2x32x256xbf16, #tpu.memory_space<vmem>>, vector<1x32x96xbf16>
    %7 = vector.shape_cast %6 : vector<1x32x96xbf16> to vector<32x96xbf16>
    %c0_7 = arith.constant 0 : index
    %c0_8 = arith.constant 0 : index
    %c96 = arith.constant 96 : index
    %8 = vector.load %arg1[%c0_7, %c0_8, %c96] : memref<2x32x256xbf16, #tpu.memory_space<vmem>>, vector<1x32x32xbf16>
    %9 = vector.shape_cast %8 : vector<1x32x32xbf16> to vector<32x32xbf16>
    %c0_9 = arith.constant 0 : index
    %c0_10 = arith.constant 0 : index
    %c128 = arith.constant 128 : index
    %10 = vector.load %arg1[%c0_9, %c0_10, %c128] : memref<2x32x256xbf16, #tpu.memory_space<vmem>>, vector<1x32x128xbf16>
    %11 = vector.shape_cast %10 : vector<1x32x128xbf16> to vector<32x128xbf16>
    %c0_11 = arith.constant 0 : index
    %c0_12 = arith.constant 0 : index
    %c0_13 = arith.constant 0 : index
    %12 = vector.load %arg2[%c0_11, %c0_12, %c0_13] : memref<2x128x32xbf16, #tpu.memory_space<vmem>>, vector<1x128x32xbf16>
    %13 = vector.shape_cast %12 : vector<1x128x32xbf16> to vector<128x32xbf16>
    %c8 = arith.constant 8 : index
    %c0_14 = arith.constant 0 : index
    %14 = vector.load %arg3[%c8, %c0_14] : memref<26x128xf32, #tpu.memory_space<vmem>>, vector<1x96xf32>
    %c9 = arith.constant 9 : index
    %c0_15 = arith.constant 0 : index
    %15 = vector.load %arg3[%c9, %c0_15] : memref<26x128xf32, #tpu.memory_space<vmem>>, vector<1x32xf32>
    %c10 = arith.constant 10 : index
    %c0_16 = arith.constant 0 : index
    %16 = vector.load %arg3[%c10, %c0_16] : memref<26x128xf32, #tpu.memory_space<vmem>>, vector<1x32xf32>
    %c11 = arith.constant 11 : index
    %c0_17 = arith.constant 0 : index
    %17 = vector.load %arg3[%c11, %c0_17] : memref<26x128xf32, #tpu.memory_space<vmem>>, vector<1x32xf32>
    %c12 = arith.constant 12 : index
    %c0_18 = arith.constant 0 : index
    %18 = vector.load %arg3[%c12, %c0_18] : memref<26x128xf32, #tpu.memory_space<vmem>>, vector<1x128xf32>
    %c13 = arith.constant 13 : index
    %c0_19 = arith.constant 0 : index
    %19 = vector.load %arg3[%c13, %c0_19] : memref<26x128xf32, #tpu.memory_space<vmem>>, vector<1x32xf32>
    %c14 = arith.constant 14 : index
    %c0_20 = arith.constant 0 : index
    %20 = vector.load %arg3[%c14, %c0_20] : memref<26x128xf32, #tpu.memory_space<vmem>>, vector<1x32xf32>
    %c15 = arith.constant 15 : index
    %c0_21 = arith.constant 0 : index
    %21 = vector.load %arg3[%c15, %c0_21] : memref<26x128xf32, #tpu.memory_space<vmem>>, vector<1x32xf32>
    %22 = arith.truncf %5 : vector<16x32xf32> to vector<16x32xbf16>
    %cst = arith.constant dense<0.000000e+00> : vector<16x96xf32>
    %23 = tpu.matmul %22, %7, %cst {dimension_numbers = #tpu.dot_dimension_numbers<[1], [0], [0], [1], [0, 0, 1, 1], [], []>} : vector<16x32xbf16>, vector<32x96xbf16>, vector<16x96xf32> -> vector<16x96xf32>
    %24 = vector.broadcast %14 : vector<1x96xf32> to vector<16x96xf32>
    %25 = arith.addf %23, %24 : vector<16x96xf32>
    %26 = vector.extract_strided_slice %25 {offsets = [0, 0], sizes = [16, 32], strides = [1, 1]} : vector<16x96xf32> to vector<16x32xf32>
    %27 = arith.truncf %26 : vector<16x32xf32> to vector<16x32xbf16>
    %28 = vector.extract_strided_slice %25 {offsets = [0, 32], sizes = [16, 32], strides = [1, 1]} : vector<16x96xf32> to vector<16x32xf32>
    %29 = arith.truncf %28 : vector<16x32xf32> to vector<16x32xbf16>
    %30 = vector.extract_strided_slice %25 {offsets = [0, 64], sizes = [16, 32], strides = [1, 1]} : vector<16x96xf32> to vector<16x32xf32>
    %31 = arith.truncf %30 : vector<16x32xf32> to vector<16x32xbf16>
    %32 = vector.extract_strided_slice %27 {offsets = [0, 0], sizes = [16, 8], strides = [1, 1]} : vector<16x32xbf16> to vector<16x8xbf16>
    %33 = vector.shape_cast %32 : vector<16x8xbf16> to vector<2x8x8xbf16>
    %34 = vector.extract_strided_slice %29 {offsets = [0, 0], sizes = [16, 8], strides = [1, 1]} : vector<16x32xbf16> to vector<16x8xbf16>
    %35 = vector.shape_cast %34 : vector<16x8xbf16> to vector<2x8x8xbf16>
    %36 = vector.extract_strided_slice %31 {offsets = [0, 0], sizes = [16, 8], strides = [1, 1]} : vector<16x32xbf16> to vector<16x8xbf16>
    %37 = vector.shape_cast %36 : vector<16x8xbf16> to vector<2x8x8xbf16>
    "tpu.trace_start"() <{level = 10 : i32, message = "bqh,bkh->bqk"}> : () -> ()
    %cst_22 = arith.constant dense<0.000000e+00> : vector<2x8x8xf32>
    %38 = tpu.matmul %33, %35, %cst_22 {dimension_numbers = #tpu.dot_dimension_numbers<[2], [2], [1], [1], [0, 0, 0, 1, 1, 1], [0], [0]>} : vector<2x8x8xbf16>, vector<2x8x8xbf16>, vector<2x8x8xf32> -> vector<2x8x8xf32>
    "tpu.trace_stop"() : () -> ()
    %cst_23 = arith.constant dense<0xFF800000> : vector<2x8xf32>
    %39 = vector.multi_reduction <maximumf>, %38, %cst_23 [2] : vector<2x8x8xf32> to vector<2x8xf32>
    %40 = vector.shape_cast %39 : vector<2x8xf32> to vector<2x8x1xf32>
    %41 = vector.broadcast %40 : vector<2x8x1xf32> to vector<2x8x8xf32>
    %42 = arith.subf %38, %41 : vector<2x8x8xf32>
    %43 = math.exp %42 : vector<2x8x8xf32>
    %cst_24 = arith.constant dense<0.000000e+00> : vector<2x8xf32>
    %44 = vector.multi_reduction <add>, %43, %cst_24 [2] : vector<2x8x8xf32> to vector<2x8xf32>
    %45 = vector.shape_cast %44 : vector<2x8xf32> to vector<2x8x1xf32>
    %46 = tpu.reciprocal %45 {approx = true} : vector<2x8x1xf32> -> vector<2x8x1xf32>
    %47 = vector.broadcast %46 : vector<2x8x1xf32> to vector<2x8x8xf32>
    %48 = arith.mulf %43, %47 : vector<2x8x8xf32>
    %49 = arith.truncf %48 : vector<2x8x8xf32> to vector<2x8x8xbf16>
    "tpu.trace_start"() <{level = 10 : i32, message = "bqk,bkh->bqh"}> : () -> ()
    %cst_25 = arith.constant dense<0.000000e+00> : vector<2x8x8xf32>
    %50 = tpu.matmul %49, %37, %cst_25 {dimension_numbers = #tpu.dot_dimension_numbers<[2], [1], [1], [2], [0, 0, 0, 1, 1, 2], [0], [0]>} : vector<2x8x8xbf16>, vector<2x8x8xbf16>, vector<2x8x8xf32> -> vector<2x8x8xf32>
    "tpu.trace_stop"() : () -> ()
    %51 = vector.shape_cast %50 : vector<2x8x8xf32> to vector<16x8xf32>
    %52 = vector.extract_strided_slice %27 {offsets = [0, 8], sizes = [16, 8], strides = [1, 1]} : vector<16x32xbf16> to vector<16x8xbf16>
    %53 = vector.shape_cast %52 : vector<16x8xbf16> to vector<2x8x8xbf16>
    %54 = vector.extract_strided_slice %29 {offsets = [0, 8], sizes = [16, 8], strides = [1, 1]} : vector<16x32xbf16> to vector<16x8xbf16>
    %55 = vector.shape_cast %54 : vector<16x8xbf16> to vector<2x8x8xbf16>
    %56 = vector.extract_strided_slice %31 {offsets = [0, 8], sizes = [16, 8], strides = [1, 1]} : vector<16x32xbf16> to vector<16x8xbf16>
    %57 = vector.shape_cast %56 : vector<16x8xbf16> to vector<2x8x8xbf16>
    "tpu.trace_start"() <{level = 10 : i32, message = "bqh,bkh->bqk"}> : () -> ()
    %cst_26 = arith.constant dense<0.000000e+00> : vector<2x8x8xf32>
    %58 = tpu.matmul %53, %55, %cst_26 {dimension_numbers = #tpu.dot_dimension_numbers<[2], [2], [1], [1], [0, 0, 0, 1, 1, 1], [0], [0]>} : vector<2x8x8xbf16>, vector<2x8x8xbf16>, vector<2x8x8xf32> -> vector<2x8x8xf32>
    "tpu.trace_stop"() : () -> ()
    %cst_27 = arith.constant dense<0xFF800000> : vector<2x8xf32>
    %59 = vector.multi_reduction <maximumf>, %58, %cst_27 [2] : vector<2x8x8xf32> to vector<2x8xf32>
    %60 = vector.shape_cast %59 : vector<2x8xf32> to vector<2x8x1xf32>
    %61 = vector.broadcast %60 : vector<2x8x1xf32> to vector<2x8x8xf32>
    %62 = arith.subf %58, %61 : vector<2x8x8xf32>
    %63 = math.exp %62 : vector<2x8x8xf32>
    %cst_28 = arith.constant dense<0.000000e+00> : vector<2x8xf32>
    %64 = vector.multi_reduction <add>, %63, %cst_28 [2] : vector<2x8x8xf32> to vector<2x8xf32>
    %65 = vector.shape_cast %64 : vector<2x8xf32> to vector<2x8x1xf32>
    %66 = tpu.reciprocal %65 {approx = true} : vector<2x8x1xf32> -> vector<2x8x1xf32>
    %67 = vector.broadcast %66 : vector<2x8x1xf32> to vector<2x8x8xf32>
    %68 = arith.mulf %63, %67 : vector<2x8x8xf32>
    %69 = arith.truncf %68 : vector<2x8x8xf32> to vector<2x8x8xbf16>
    "tpu.trace_start"() <{level = 10 : i32, message = "bqk,bkh->bqh"}> : () -> ()
    %cst_29 = arith.constant dense<0.000000e+00> : vector<2x8x8xf32>
    %70 = tpu.matmul %69, %57, %cst_29 {dimension_numbers = #tpu.dot_dimension_numbers<[2], [1], [1], [2], [0, 0, 0, 1, 1, 2], [0], [0]>} : vector<2x8x8xbf16>, vector<2x8x8xbf16>, vector<2x8x8xf32> -> vector<2x8x8xf32>
    "tpu.trace_stop"() : () -> ()
    %71 = vector.shape_cast %70 : vector<2x8x8xf32> to vector<16x8xf32>
    %72 = vector.extract_strided_slice %27 {offsets = [0, 16], sizes = [16, 8], strides = [1, 1]} : vector<16x32xbf16> to vector<16x8xbf16>
    %73 = vector.shape_cast %72 : vector<16x8xbf16> to vector<2x8x8xbf16>
    %74 = vector.extract_strided_slice %29 {offsets = [0, 16], sizes = [16, 8], strides = [1, 1]} : vector<16x32xbf16> to vector<16x8xbf16>
    %75 = vector.shape_cast %74 : vector<16x8xbf16> to vector<2x8x8xbf16>
    %76 = vector.extract_strided_slice %31 {offsets = [0, 16], sizes = [16, 8], strides = [1, 1]} : vector<16x32xbf16> to vector<16x8xbf16>
    %77 = vector.shape_cast %76 : vector<16x8xbf16> to vector<2x8x8xbf16>
    "tpu.trace_start"() <{level = 10 : i32, message = "bqh,bkh->bqk"}> : () -> ()
    %cst_30 = arith.constant dense<0.000000e+00> : vector<2x8x8xf32>
    %78 = tpu.matmul %73, %75, %cst_30 {dimension_numbers = #tpu.dot_dimension_numbers<[2], [2], [1], [1], [0, 0, 0, 1, 1, 1], [0], [0]>} : vector<2x8x8xbf16>, vector<2x8x8xbf16>, vector<2x8x8xf32> -> vector<2x8x8xf32>
    "tpu.trace_stop"() : () -> ()
    %cst_31 = arith.constant dense<0xFF800000> : vector<2x8xf32>
    %79 = vector.multi_reduction <maximumf>, %78, %cst_31 [2] : vector<2x8x8xf32> to vector<2x8xf32>
    %80 = vector.shape_cast %79 : vector<2x8xf32> to vector<2x8x1xf32>
    %81 = vector.broadcast %80 : vector<2x8x1xf32> to vector<2x8x8xf32>
    %82 = arith.subf %78, %81 : vector<2x8x8xf32>
    %83 = math.exp %82 : vector<2x8x8xf32>
    %cst_32 = arith.constant dense<0.000000e+00> : vector<2x8xf32>
    %84 = vector.multi_reduction <add>, %83, %cst_32 [2] : vector<2x8x8xf32> to vector<2x8xf32>
    %85 = vector.shape_cast %84 : vector<2x8xf32> to vector<2x8x1xf32>
    %86 = tpu.reciprocal %85 {approx = true} : vector<2x8x1xf32> -> vector<2x8x1xf32>
    %87 = vector.broadcast %86 : vector<2x8x1xf32> to vector<2x8x8xf32>
    %88 = arith.mulf %83, %87 : vector<2x8x8xf32>
    %89 = arith.truncf %88 : vector<2x8x8xf32> to vector<2x8x8xbf16>
    "tpu.trace_start"() <{level = 10 : i32, message = "bqk,bkh->bqh"}> : () -> ()
    %cst_33 = arith.constant dense<0.000000e+00> : vector<2x8x8xf32>
    %90 = tpu.matmul %89, %77, %cst_33 {dimension_numbers = #tpu.dot_dimension_numbers<[2], [1], [1], [2], [0, 0, 0, 1, 1, 2], [0], [0]>} : vector<2x8x8xbf16>, vector<2x8x8xbf16>, vector<2x8x8xf32> -> vector<2x8x8xf32>
    "tpu.trace_stop"() : () -> ()
    %91 = vector.shape_cast %90 : vector<2x8x8xf32> to vector<16x8xf32>
    %92 = vector.extract_strided_slice %27 {offsets = [0, 24], sizes = [16, 8], strides = [1, 1]} : vector<16x32xbf16> to vector<16x8xbf16>
    %93 = vector.shape_cast %92 : vector<16x8xbf16> to vector<2x8x8xbf16>
    %94 = vector.extract_strided_slice %29 {offsets = [0, 24], sizes = [16, 8], strides = [1, 1]} : vector<16x32xbf16> to vector<16x8xbf16>
    %95 = vector.shape_cast %94 : vector<16x8xbf16> to vector<2x8x8xbf16>
    %96 = vector.extract_strided_slice %31 {offsets = [0, 24], sizes = [16, 8], strides = [1, 1]} : vector<16x32xbf16> to vector<16x8xbf16>
    %97 = vector.shape_cast %96 : vector<16x8xbf16> to vector<2x8x8xbf16>
    "tpu.trace_start"() <{level = 10 : i32, message = "bqh,bkh->bqk"}> : () -> ()
    %cst_34 = arith.constant dense<0.000000e+00> : vector<2x8x8xf32>
    %98 = tpu.matmul %93, %95, %cst_34 {dimension_numbers = #tpu.dot_dimension_numbers<[2], [2], [1], [1], [0, 0, 0, 1, 1, 1], [0], [0]>} : vector<2x8x8xbf16>, vector<2x8x8xbf16>, vector<2x8x8xf32> -> vector<2x8x8xf32>
    "tpu.trace_stop"() : () -> ()
    %cst_35 = arith.constant dense<0xFF800000> : vector<2x8xf32>
    %99 = vector.multi_reduction <maximumf>, %98, %cst_35 [2] : vector<2x8x8xf32> to vector<2x8xf32>
    %100 = vector.shape_cast %99 : vector<2x8xf32> to vector<2x8x1xf32>
    %101 = vector.broadcast %100 : vector<2x8x1xf32> to vector<2x8x8xf32>
    %102 = arith.subf %98, %101 : vector<2x8x8xf32>
    %103 = math.exp %102 : vector<2x8x8xf32>
    %cst_36 = arith.constant dense<0.000000e+00> : vector<2x8xf32>
    %104 = vector.multi_reduction <add>, %103, %cst_36 [2] : vector<2x8x8xf32> to vector<2x8xf32>
    %105 = vector.shape_cast %104 : vector<2x8xf32> to vector<2x8x1xf32>
    %106 = tpu.reciprocal %105 {approx = true} : vector<2x8x1xf32> -> vector<2x8x1xf32>
    %107 = vector.broadcast %106 : vector<2x8x1xf32> to vector<2x8x8xf32>
    %108 = arith.mulf %103, %107 : vector<2x8x8xf32>
    %109 = arith.truncf %108 : vector<2x8x8xf32> to vector<2x8x8xbf16>
    "tpu.trace_start"() <{level = 10 : i32, message = "bqk,bkh->bqh"}> : () -> ()
    %cst_37 = arith.constant dense<0.000000e+00> : vector<2x8x8xf32>
    %110 = tpu.matmul %109, %97, %cst_37 {dimension_numbers = #tpu.dot_dimension_numbers<[2], [1], [1], [2], [0, 0, 0, 1, 1, 2], [0], [0]>} : vector<2x8x8xbf16>, vector<2x8x8xbf16>, vector<2x8x8xf32> -> vector<2x8x8xf32>
    "tpu.trace_stop"() : () -> ()
    %111 = vector.shape_cast %110 : vector<2x8x8xf32> to vector<16x8xf32>
    %112 = tpu.concatenate %51, %71, %91, %111 in 1 : vector<16x8xf32>, vector<16x8xf32>, vector<16x8xf32>, vector<16x8xf32> -> vector<16x32xf32>
    %113 = arith.truncf %112 : vector<16x32xf32> to vector<16x32xbf16>
    %cst_38 = arith.constant dense<0.000000e+00> : vector<16x32xf32>
    %114 = tpu.matmul %113, %9, %cst_38 {dimension_numbers = #tpu.dot_dimension_numbers<[1], [0], [0], [1], [0, 0, 1, 1], [], []>} : vector<16x32xbf16>, vector<32x32xbf16>, vector<16x32xf32> -> vector<16x32xf32>
    %115 = vector.broadcast %15 : vector<1x32xf32> to vector<16x32xf32>
    %116 = arith.addf %114, %115 : vector<16x32xf32>
    %117 = arith.addf %5, %116 : vector<16x32xf32>
    %cst_39 = arith.constant dense<0.000000e+00> : vector<16xf32>
    %118 = vector.multi_reduction <add>, %117, %cst_39 [1] : vector<16x32xf32> to vector<16xf32>
    %119 = vector.shape_cast %118 : vector<16xf32> to vector<16x1xf32>
    %cst_40 = arith.constant 3.200000e+01 : f32
    %120 = vector.broadcast %cst_40 : f32 to vector<16x1xf32>
    %121 = arith.divf %119, %120 : vector<16x1xf32>
    %122 = vector.broadcast %121 : vector<16x1xf32> to vector<16x32xf32>
    %123 = arith.subf %117, %122 : vector<16x32xf32>
    %124 = arith.mulf %123, %123 : vector<16x32xf32>
    %cst_41 = arith.constant dense<0.000000e+00> : vector<16xf32>
    %125 = vector.multi_reduction <add>, %124, %cst_41 [1] : vector<16x32xf32> to vector<16xf32>
    %126 = vector.shape_cast %125 : vector<16xf32> to vector<16x1xf32>
    %cst_42 = arith.constant 3.200000e+01 : f32
    %127 = vector.broadcast %cst_42 : f32 to vector<16x1xf32>
    %128 = arith.divf %126, %127 : vector<16x1xf32>
    %129 = vector.broadcast %121 : vector<16x1xf32> to vector<16x32xf32>
    %130 = arith.subf %117, %129 : vector<16x32xf32>
    %cst_43 = arith.constant 9.99999974E-6 : f32
    %131 = vector.broadcast %cst_43 : f32 to vector<16x1xf32>
    %132 = arith.addf %128, %131 : vector<16x1xf32>
    %133 = math.rsqrt %132 : vector<16x1xf32>
    %134 = vector.broadcast %133 : vector<16x1xf32> to vector<16x32xf32>
    %135 = arith.mulf %130, %134 : vector<16x32xf32>
    %136 = vector.broadcast %16 : vector<1x32xf32> to vector<16x32xf32>
    %137 = arith.mulf %135, %136 : vector<16x32xf32>
    %138 = vector.broadcast %17 : vector<1x32xf32> to vector<16x32xf32>
    %139 = arith.addf %137, %138 : vector<16x32xf32>
    %140 = arith.truncf %139 : vector<16x32xf32> to vector<16x32xbf16>
    %cst_44 = arith.constant dense<0.000000e+00> : vector<16x128xf32>
    %141 = tpu.matmul %140, %11, %cst_44 {dimension_numbers = #tpu.dot_dimension_numbers<[1], [0], [0], [1], [0, 0, 1, 1], [], []>} : vector<16x32xbf16>, vector<32x128xbf16>, vector<16x128xf32> -> vector<16x128xf32>
    %142 = vector.broadcast %18 : vector<1x128xf32> to vector<16x128xf32>
    %143 = arith.addf %141, %142 : vector<16x128xf32>
    %cst_45 = arith.constant 0.000000e+00 : f32
    %144 = vector.broadcast %cst_45 : f32 to vector<16x128xf32>
    %145 = arith.maximumf %143, %144 : vector<16x128xf32>
    %146 = arith.truncf %145 : vector<16x128xf32> to vector<16x128xbf16>
    %cst_46 = arith.constant dense<0.000000e+00> : vector<16x32xf32>
    %147 = tpu.matmul %146, %13, %cst_46 {dimension_numbers = #tpu.dot_dimension_numbers<[1], [0], [0], [1], [0, 0, 1, 1], [], []>} : vector<16x128xbf16>, vector<128x32xbf16>, vector<16x32xf32> -> vector<16x32xf32>
    %148 = vector.broadcast %19 : vector<1x32xf32> to vector<16x32xf32>
    %149 = arith.addf %147, %148 : vector<16x32xf32>
    %150 = arith.addf %139, %149 : vector<16x32xf32>
    %cst_47 = arith.constant dense<0.000000e+00> : vector<16xf32>
    %151 = vector.multi_reduction <add>, %150, %cst_47 [1] : vector<16x32xf32> to vector<16xf32>
    %152 = vector.shape_cast %151 : vector<16xf32> to vector<16x1xf32>
    %cst_48 = arith.constant 3.200000e+01 : f32
    %153 = vector.broadcast %cst_48 : f32 to vector<16x1xf32>
    %154 = arith.divf %152, %153 : vector<16x1xf32>
    %155 = vector.broadcast %154 : vector<16x1xf32> to vector<16x32xf32>
    %156 = arith.subf %150, %155 : vector<16x32xf32>
    %157 = arith.mulf %156, %156 : vector<16x32xf32>
    %cst_49 = arith.constant dense<0.000000e+00> : vector<16xf32>
    %158 = vector.multi_reduction <add>, %157, %cst_49 [1] : vector<16x32xf32> to vector<16xf32>
    %159 = vector.shape_cast %158 : vector<16xf32> to vector<16x1xf32>
    %cst_50 = arith.constant 3.200000e+01 : f32
    %160 = vector.broadcast %cst_50 : f32 to vector<16x1xf32>
    %161 = arith.divf %159, %160 : vector<16x1xf32>
    %162 = vector.broadcast %154 : vector<16x1xf32> to vector<16x32xf32>
    %163 = arith.subf %150, %162 : vector<16x32xf32>
    %cst_51 = arith.constant 9.99999974E-6 : f32
    %164 = vector.broadcast %cst_51 : f32 to vector<16x1xf32>
    %165 = arith.addf %161, %164 : vector<16x1xf32>
    %166 = math.rsqrt %165 : vector<16x1xf32>
    %167 = vector.broadcast %166 : vector<16x1xf32> to vector<16x32xf32>
    %168 = arith.mulf %163, %167 : vector<16x32xf32>
    %169 = vector.broadcast %20 : vector<1x32xf32> to vector<16x32xf32>
    %170 = arith.mulf %168, %169 : vector<16x32xf32>
    %171 = vector.broadcast %21 : vector<1x32xf32> to vector<16x32xf32>
    %172 = arith.addf %170, %171 : vector<16x32xf32>
    %c1 = arith.constant 1 : index
    %c0_52 = arith.constant 0 : index
    %c0_53 = arith.constant 0 : index
    %173 = vector.load %arg1[%c1, %c0_52, %c0_53] : memref<2x32x256xbf16, #tpu.memory_space<vmem>>, vector<1x32x96xbf16>
    %174 = vector.shape_cast %173 : vector<1x32x96xbf16> to vector<32x96xbf16>
    %c1_54 = arith.constant 1 : index
    %c0_55 = arith.constant 0 : index
    %c96_56 = arith.constant 96 : index
    %175 = vector.load %arg1[%c1_54, %c0_55, %c96_56] : memref<2x32x256xbf16, #tpu.memory_space<vmem>>, vector<1x32x32xbf16>
    %176 = vector.shape_cast %175 : vector<1x32x32xbf16> to vector<32x32xbf16>
    %c1_57 = arith.constant 1 : index
    %c0_58 = arith.constant 0 : index
    %c128_59 = arith.constant 128 : index
    %177 = vector.load %arg1[%c1_57, %c0_58, %c128_59] : memref<2x32x256xbf16, #tpu.memory_space<vmem>>, vector<1x32x128xbf16>
    %178 = vector.shape_cast %177 : vector<1x32x128xbf16> to vector<32x128xbf16>
    %c1_60 = arith.constant 1 : index
    %c0_61 = arith.constant 0 : index
    %c0_62 = arith.constant 0 : index
    %179 = vector.load %arg2[%c1_60, %c0_61, %c0_62] : memref<2x128x32xbf16, #tpu.memory_space<vmem>>, vector<1x128x32xbf16>
    %180 = vector.shape_cast %179 : vector<1x128x32xbf16> to vector<128x32xbf16>
    %c16 = arith.constant 16 : index
    %c0_63 = arith.constant 0 : index
    %181 = vector.load %arg3[%c16, %c0_63] : memref<26x128xf32, #tpu.memory_space<vmem>>, vector<1x96xf32>
    %c17 = arith.constant 17 : index
    %c0_64 = arith.constant 0 : index
    %182 = vector.load %arg3[%c17, %c0_64] : memref<26x128xf32, #tpu.memory_space<vmem>>, vector<1x32xf32>
    %c18 = arith.constant 18 : index
    %c0_65 = arith.constant 0 : index
    %183 = vector.load %arg3[%c18, %c0_65] : memref<26x128xf32, #tpu.memory_space<vmem>>, vector<1x32xf32>
    %c19 = arith.constant 19 : index
    %c0_66 = arith.constant 0 : index
    %184 = vector.load %arg3[%c19, %c0_66] : memref<26x128xf32, #tpu.memory_space<vmem>>, vector<1x32xf32>
    %c20 = arith.constant 20 : index
    %c0_67 = arith.constant 0 : index
    %185 = vector.load %arg3[%c20, %c0_67] : memref<26x128xf32, #tpu.memory_space<vmem>>, vector<1x128xf32>
    %c21 = arith.constant 21 : index
    %c0_68 = arith.constant 0 : index
    %186 = vector.load %arg3[%c21, %c0_68] : memref<26x128xf32, #tpu.memory_space<vmem>>, vector<1x32xf32>
    %c22 = arith.constant 22 : index
    %c0_69 = arith.constant 0 : index
    %187 = vector.load %arg3[%c22, %c0_69] : memref<26x128xf32, #tpu.memory_space<vmem>>, vector<1x32xf32>
    %c23 = arith.constant 23 : index
    %c0_70 = arith.constant 0 : index
    %188 = vector.load %arg3[%c23, %c0_70] : memref<26x128xf32, #tpu.memory_space<vmem>>, vector<1x32xf32>
    %189 = arith.truncf %172 : vector<16x32xf32> to vector<16x32xbf16>
    %cst_71 = arith.constant dense<0.000000e+00> : vector<16x96xf32>
    %190 = tpu.matmul %189, %174, %cst_71 {dimension_numbers = #tpu.dot_dimension_numbers<[1], [0], [0], [1], [0, 0, 1, 1], [], []>} : vector<16x32xbf16>, vector<32x96xbf16>, vector<16x96xf32> -> vector<16x96xf32>
    %191 = vector.broadcast %181 : vector<1x96xf32> to vector<16x96xf32>
    %192 = arith.addf %190, %191 : vector<16x96xf32>
    %193 = vector.extract_strided_slice %192 {offsets = [0, 0], sizes = [16, 32], strides = [1, 1]} : vector<16x96xf32> to vector<16x32xf32>
    %194 = arith.truncf %193 : vector<16x32xf32> to vector<16x32xbf16>
    %195 = vector.extract_strided_slice %192 {offsets = [0, 32], sizes = [16, 32], strides = [1, 1]} : vector<16x96xf32> to vector<16x32xf32>
    %196 = arith.truncf %195 : vector<16x32xf32> to vector<16x32xbf16>
    %197 = vector.extract_strided_slice %192 {offsets = [0, 64], sizes = [16, 32], strides = [1, 1]} : vector<16x96xf32> to vector<16x32xf32>
    %198 = arith.truncf %197 : vector<16x32xf32> to vector<16x32xbf16>
    %199 = vector.extract_strided_slice %194 {offsets = [0, 0], sizes = [16, 16], strides = [1, 1]} : vector<16x32xbf16> to vector<16x16xbf16>
    %200 = vector.shape_cast %199 : vector<16x16xbf16> to vector<2x8x16xbf16>
    %201 = vector.extract_strided_slice %196 {offsets = [0, 0], sizes = [16, 16], strides = [1, 1]} : vector<16x32xbf16> to vector<16x16xbf16>
    %202 = vector.shape_cast %201 : vector<16x16xbf16> to vector<2x8x16xbf16>
    %203 = vector.extract_strided_slice %198 {offsets = [0, 0], sizes = [16, 16], strides = [1, 1]} : vector<16x32xbf16> to vector<16x16xbf16>
    %204 = vector.shape_cast %203 : vector<16x16xbf16> to vector<2x8x16xbf16>
    "tpu.trace_start"() <{level = 10 : i32, message = "bqh,bkh->bqk"}> : () -> ()
    %cst_72 = arith.constant dense<0.000000e+00> : vector<2x8x8xf32>
    %205 = tpu.matmul %200, %202, %cst_72 {dimension_numbers = #tpu.dot_dimension_numbers<[2], [2], [1], [1], [0, 0, 0, 1, 1, 1], [0], [0]>} : vector<2x8x16xbf16>, vector<2x8x16xbf16>, vector<2x8x8xf32> -> vector<2x8x8xf32>
    "tpu.trace_stop"() : () -> ()
    %cst_73 = arith.constant dense<0xFF800000> : vector<2x8xf32>
    %206 = vector.multi_reduction <maximumf>, %205, %cst_73 [2] : vector<2x8x8xf32> to vector<2x8xf32>
    %207 = vector.shape_cast %206 : vector<2x8xf32> to vector<2x8x1xf32>
    %208 = vector.broadcast %207 : vector<2x8x1xf32> to vector<2x8x8xf32>
    %209 = arith.subf %205, %208 : vector<2x8x8xf32>
    %210 = math.exp %209 : vector<2x8x8xf32>
    %cst_74 = arith.constant dense<0.000000e+00> : vector<2x8xf32>
    %211 = vector.multi_reduction <add>, %210, %cst_74 [2] : vector<2x8x8xf32> to vector<2x8xf32>
    %212 = vector.shape_cast %211 : vector<2x8xf32> to vector<2x8x1xf32>
    %213 = tpu.reciprocal %212 {approx = true} : vector<2x8x1xf32> -> vector<2x8x1xf32>
    %214 = vector.broadcast %213 : vector<2x8x1xf32> to vector<2x8x8xf32>
    %215 = arith.mulf %210, %214 : vector<2x8x8xf32>
    %216 = arith.truncf %215 : vector<2x8x8xf32> to vector<2x8x8xbf16>
    "tpu.trace_start"() <{level = 10 : i32, message = "bqk,bkh->bqh"}> : () -> ()
    %cst_75 = arith.constant dense<0.000000e+00> : vector<2x8x16xf32>
    %217 = tpu.matmul %216, %204, %cst_75 {dimension_numbers = #tpu.dot_dimension_numbers<[2], [1], [1], [2], [0, 0, 0, 1, 1, 2], [0], [0]>} : vector<2x8x8xbf16>, vector<2x8x16xbf16>, vector<2x8x16xf32> -> vector<2x8x16xf32>
    "tpu.trace_stop"() : () -> ()
    %218 = vector.shape_cast %217 : vector<2x8x16xf32> to vector<16x16xf32>
    %219 = vector.extract_strided_slice %194 {offsets = [0, 16], sizes = [16, 16], strides = [1, 1]} : vector<16x32xbf16> to vector<16x16xbf16>
    %220 = vector.shape_cast %219 : vector<16x16xbf16> to vector<2x8x16xbf16>
    %221 = vector.extract_strided_slice %196 {offsets = [0, 16], sizes = [16, 16], strides = [1, 1]} : vector<16x32xbf16> to vector<16x16xbf16>
    %222 = vector.shape_cast %221 : vector<16x16xbf16> to vector<2x8x16xbf16>
    %223 = vector.extract_strided_slice %198 {offsets = [0, 16], sizes = [16, 16], strides = [1, 1]} : vector<16x32xbf16> to vector<16x16xbf16>
    %224 = vector.shape_cast %223 : vector<16x16xbf16> to vector<2x8x16xbf16>
    "tpu.trace_start"() <{level = 10 : i32, message = "bqh,bkh->bqk"}> : () -> ()
    %cst_76 = arith.constant dense<0.000000e+00> : vector<2x8x8xf32>
    %225 = tpu.matmul %220, %222, %cst_76 {dimension_numbers = #tpu.dot_dimension_numbers<[2], [2], [1], [1], [0, 0, 0, 1, 1, 1], [0], [0]>} : vector<2x8x16xbf16>, vector<2x8x16xbf16>, vector<2x8x8xf32> -> vector<2x8x8xf32>
    "tpu.trace_stop"() : () -> ()
    %cst_77 = arith.constant dense<0xFF800000> : vector<2x8xf32>
    %226 = vector.multi_reduction <maximumf>, %225, %cst_77 [2] : vector<2x8x8xf32> to vector<2x8xf32>
    %227 = vector.shape_cast %226 : vector<2x8xf32> to vector<2x8x1xf32>
    %228 = vector.broadcast %227 : vector<2x8x1xf32> to vector<2x8x8xf32>
    %229 = arith.subf %225, %228 : vector<2x8x8xf32>
    %230 = math.exp %229 : vector<2x8x8xf32>
    %cst_78 = arith.constant dense<0.000000e+00> : vector<2x8xf32>
    %231 = vector.multi_reduction <add>, %230, %cst_78 [2] : vector<2x8x8xf32> to vector<2x8xf32>
    %232 = vector.shape_cast %231 : vector<2x8xf32> to vector<2x8x1xf32>
    %233 = tpu.reciprocal %232 {approx = true} : vector<2x8x1xf32> -> vector<2x8x1xf32>
    %234 = vector.broadcast %233 : vector<2x8x1xf32> to vector<2x8x8xf32>
    %235 = arith.mulf %230, %234 : vector<2x8x8xf32>
    %236 = arith.truncf %235 : vector<2x8x8xf32> to vector<2x8x8xbf16>
    "tpu.trace_start"() <{level = 10 : i32, message = "bqk,bkh->bqh"}> : () -> ()
    %cst_79 = arith.constant dense<0.000000e+00> : vector<2x8x16xf32>
    %237 = tpu.matmul %236, %224, %cst_79 {dimension_numbers = #tpu.dot_dimension_numbers<[2], [1], [1], [2], [0, 0, 0, 1, 1, 2], [0], [0]>} : vector<2x8x8xbf16>, vector<2x8x16xbf16>, vector<2x8x16xf32> -> vector<2x8x16xf32>
    "tpu.trace_stop"() : () -> ()
    %238 = vector.shape_cast %237 : vector<2x8x16xf32> to vector<16x16xf32>
    %239 = tpu.concatenate %218, %238 in 1 : vector<16x16xf32>, vector<16x16xf32> -> vector<16x32xf32>
    %240 = arith.truncf %239 : vector<16x32xf32> to vector<16x32xbf16>
    %cst_80 = arith.constant dense<0.000000e+00> : vector<16x32xf32>
    %241 = tpu.matmul %240, %176, %cst_80 {dimension_numbers = #tpu.dot_dimension_numbers<[1], [0], [0], [1], [0, 0, 1, 1], [], []>} : vector<16x32xbf16>, vector<32x32xbf16>, vector<16x32xf32> -> vector<16x32xf32>
    %242 = vector.broadcast %182 : vector<1x32xf32> to vector<16x32xf32>
    %243 = arith.addf %241, %242 : vector<16x32xf32>
    %244 = arith.addf %172, %243 : vector<16x32xf32>
    %cst_81 = arith.constant dense<0.000000e+00> : vector<16xf32>
    %245 = vector.multi_reduction <add>, %244, %cst_81 [1] : vector<16x32xf32> to vector<16xf32>
    %246 = vector.shape_cast %245 : vector<16xf32> to vector<16x1xf32>
    %cst_82 = arith.constant 3.200000e+01 : f32
    %247 = vector.broadcast %cst_82 : f32 to vector<16x1xf32>
    %248 = arith.divf %246, %247 : vector<16x1xf32>
    %249 = vector.broadcast %248 : vector<16x1xf32> to vector<16x32xf32>
    %250 = arith.subf %244, %249 : vector<16x32xf32>
    %251 = arith.mulf %250, %250 : vector<16x32xf32>
    %cst_83 = arith.constant dense<0.000000e+00> : vector<16xf32>
    %252 = vector.multi_reduction <add>, %251, %cst_83 [1] : vector<16x32xf32> to vector<16xf32>
    %253 = vector.shape_cast %252 : vector<16xf32> to vector<16x1xf32>
    %cst_84 = arith.constant 3.200000e+01 : f32
    %254 = vector.broadcast %cst_84 : f32 to vector<16x1xf32>
    %255 = arith.divf %253, %254 : vector<16x1xf32>
    %256 = vector.broadcast %248 : vector<16x1xf32> to vector<16x32xf32>
    %257 = arith.subf %244, %256 : vector<16x32xf32>
    %cst_85 = arith.constant 9.99999974E-6 : f32
    %258 = vector.broadcast %cst_85 : f32 to vector<16x1xf32>
    %259 = arith.addf %255, %258 : vector<16x1xf32>
    %260 = math.rsqrt %259 : vector<16x1xf32>
    %261 = vector.broadcast %260 : vector<16x1xf32> to vector<16x32xf32>
    %262 = arith.mulf %257, %261 : vector<16x32xf32>
    %263 = vector.broadcast %183 : vector<1x32xf32> to vector<16x32xf32>
    %264 = arith.mulf %262, %263 : vector<16x32xf32>
    %265 = vector.broadcast %184 : vector<1x32xf32> to vector<16x32xf32>
    %266 = arith.addf %264, %265 : vector<16x32xf32>
    %267 = arith.truncf %266 : vector<16x32xf32> to vector<16x32xbf16>
    %cst_86 = arith.constant dense<0.000000e+00> : vector<16x128xf32>
    %268 = tpu.matmul %267, %178, %cst_86 {dimension_numbers = #tpu.dot_dimension_numbers<[1], [0], [0], [1], [0, 0, 1, 1], [], []>} : vector<16x32xbf16>, vector<32x128xbf16>, vector<16x128xf32> -> vector<16x128xf32>
    %269 = vector.broadcast %185 : vector<1x128xf32> to vector<16x128xf32>
    %270 = arith.addf %268, %269 : vector<16x128xf32>
    %cst_87 = arith.constant 0.000000e+00 : f32
    %271 = vector.broadcast %cst_87 : f32 to vector<16x128xf32>
    %272 = arith.maximumf %270, %271 : vector<16x128xf32>
    %273 = arith.truncf %272 : vector<16x128xf32> to vector<16x128xbf16>
    %cst_88 = arith.constant dense<0.000000e+00> : vector<16x32xf32>
    %274 = tpu.matmul %273, %180, %cst_88 {dimension_numbers = #tpu.dot_dimension_numbers<[1], [0], [0], [1], [0, 0, 1, 1], [], []>} : vector<16x128xbf16>, vector<128x32xbf16>, vector<16x32xf32> -> vector<16x32xf32>
    %275 = vector.broadcast %186 : vector<1x32xf32> to vector<16x32xf32>
    %276 = arith.addf %274, %275 : vector<16x32xf32>
    %277 = arith.addf %266, %276 : vector<16x32xf32>
    %cst_89 = arith.constant dense<0.000000e+00> : vector<16xf32>
    %278 = vector.multi_reduction <add>, %277, %cst_89 [1] : vector<16x32xf32> to vector<16xf32>
    %279 = vector.shape_cast %278 : vector<16xf32> to vector<16x1xf32>
    %cst_90 = arith.constant 3.200000e+01 : f32
    %280 = vector.broadcast %cst_90 : f32 to vector<16x1xf32>
    %281 = arith.divf %279, %280 : vector<16x1xf32>
    %282 = vector.broadcast %281 : vector<16x1xf32> to vector<16x32xf32>
    %283 = arith.subf %277, %282 : vector<16x32xf32>
    %284 = arith.mulf %283, %283 : vector<16x32xf32>
    %cst_91 = arith.constant dense<0.000000e+00> : vector<16xf32>
    %285 = vector.multi_reduction <add>, %284, %cst_91 [1] : vector<16x32xf32> to vector<16xf32>
    %286 = vector.shape_cast %285 : vector<16xf32> to vector<16x1xf32>
    %cst_92 = arith.constant 3.200000e+01 : f32
    %287 = vector.broadcast %cst_92 : f32 to vector<16x1xf32>
    %288 = arith.divf %286, %287 : vector<16x1xf32>
    %289 = vector.broadcast %281 : vector<16x1xf32> to vector<16x32xf32>
    %290 = arith.subf %277, %289 : vector<16x32xf32>
    %cst_93 = arith.constant 9.99999974E-6 : f32
    %291 = vector.broadcast %cst_93 : f32 to vector<16x1xf32>
    %292 = arith.addf %288, %291 : vector<16x1xf32>
    %293 = math.rsqrt %292 : vector<16x1xf32>
    %294 = vector.broadcast %293 : vector<16x1xf32> to vector<16x32xf32>
    %295 = arith.mulf %290, %294 : vector<16x32xf32>
    %296 = vector.broadcast %187 : vector<1x32xf32> to vector<16x32xf32>
    %297 = arith.mulf %295, %296 : vector<16x32xf32>
    %298 = vector.broadcast %188 : vector<1x32xf32> to vector<16x32xf32>
    %299 = arith.addf %297, %298 : vector<16x32xf32>
    %300 = vector.shape_cast %299 : vector<16x32xf32> to vector<2x8x32xf32>
    %cst_94 = arith.constant dense<0.000000e+00> : vector<2x32xf32>
    %301 = vector.multi_reduction <add>, %300, %cst_94 [1] : vector<2x8x32xf32> to vector<2x32xf32>
    %c24 = arith.constant 24 : index
    %c0_95 = arith.constant 0 : index
    %302 = vector.load %arg3[%c24, %c0_95] : memref<26x128xf32, #tpu.memory_space<vmem>>, vector<1x32xf32>
    %c25 = arith.constant 25 : index
    %c0_96 = arith.constant 0 : index
    %303 = vector.load %arg3[%c25, %c0_96] : memref<26x128xf32, #tpu.memory_space<vmem>>, vector<1x1xf32>
    %304 = vector.broadcast %302 : vector<1x32xf32> to vector<2x32xf32>
    %305 = arith.mulf %301, %304 : vector<2x32xf32>
    %cst_97 = arith.constant dense<0.000000e+00> : vector<2xf32>
    %306 = vector.multi_reduction <add>, %305, %cst_97 [1] : vector<2x32xf32> to vector<2xf32>
    %307 = vector.shape_cast %306 : vector<2xf32> to vector<2x1xf32>
    %308 = vector.broadcast %303 : vector<1x1xf32> to vector<2x1xf32>
    %309 = arith.addf %307, %308 : vector<2x1xf32>
    %c0_98 = arith.constant 0 : index
    %c0_99 = arith.constant 0 : index
    %310 = vector.load %arg4[%c0_98, %c0_99] : memref<2x1xf32, #tpu.memory_space<vmem>>, vector<2x1xf32>
    tpu.vector_store %arg4[%c0_98, %c0_99], %309 {strides = array<i32>} : memref<2x1xf32, #tpu.memory_space<vmem>>, vector<2x1xf32>,
    return
  }
}

</mosaic_0001>

<llo_original>
// kernel: forward.1
$region0: #{forward.1}
  #allocation0 [shape = 'u32[]', space=smem, size = 0x4, offset = 0x4, fixed_abs, tag = 'smem constant byte address 0x4 - core index']
  #allocation1 [shape = 'u32[72,128]{1,0:T(1,128)}', space=vmem, size = 0x9000, scoped, tag = 'internal scratch']
  %s0 = inlined_call_operand.vmem [shape: f32[2,8,32], index: 0, kind: input, shape index: {}]
  %s1 = inlined_call_operand.vmem [shape: bf16[2,32,256], index: 1, kind: input, shape index: {}]
  %s2 = inlined_call_operand.vmem [shape: bf16[2,128,32], index: 2, kind: input, shape index: {}]
  %s3 = inlined_call_operand.vmem [shape: f32[26,128], index: 3, kind: input, shape index: {}]
  %s4 = inlined_call_operand.vmem [shape: f32[2,1], index: 4, kind: output, shape index: {}]
  %s5 = sld [smem:[#allocation0]]
  $region26: #{forward.1} parent=0
    _
  %s7 = ssub.s32 1, %s5
  %s8 = scalar_select 0, %s7, %s5
  // Predicated region
  $region2: #{forward.1} parent=0 // pred_check
    _
  $region3: #{forward.1} parent=0 // pred_check_branch
    %10 = sbr.rel (0) target = $region5
  $region4: #{forward.1} parent=0 // pred_region
    _
  $region5: #{forward.1} parent=0 // pred_fallthru
    _
  // Predicated region
  $region6: #{forward.1} parent=0 // pred_check
    _
  $region7: #{forward.1} parent=0 // pred_check_branch
    %12 = sbr.rel (0) target = $region9
  $region8: #{forward.1} parent=0 // pred_region
    _
  $region9: #{forward.1} parent=0 // pred_fallthru
    _
  // Predicated region
  $region10: #{forward.1} parent=0 // pred_check
    _
  $region11: #{forward.1} parent=0 // pred_check_branch
    %14 = sbr.rel (0) target = $region13
  $region12: #{forward.1} parent=0 // pred_region
    _
  $region13: #{forward.1} parent=0 // pred_fallthru
    _
  // Predicated region
  $region14: #{forward.1} parent=0 // pred_check
    _
  $region15: #{forward.1} parent=0 // pred_check_branch
    %16 = sbr.rel (0) target = $region17
  $region16: #{forward.1} parent=0 // pred_region
    _
  $region17: #{forward.1} parent=0 // pred_fallthru
    _
  %v18 = vld [vmem:[%s3] sm:$0xff]
  %v19 = vld [vmem:[%s0] sm:$0xff]
  %v20 = vld [vmem:[%s0 + $0x8] sm:$0xff]
  %v21 = vadd.f32 %v19, %v18
  %v22 = vadd.f32 %v20, %v18
  %v23 = vld [vmem:[%s1] sm:$0xf]
  %v24 = vld [vmem:[%s1 + $0x8] sm:$0xf]
  %v25 = vld [vmem:[%s1 + $0x10] sm:$0xf]
  %v26 = vld [vmem:[%s1 + $0x18] sm:$0xf]
  %v27 = vld [vmem:[%s1 + $0x4] sm:$0xf]
  %v28 = vld [vmem:[%s1 + $0xc] sm:$0xf]
  %v29 = vld [vmem:[%s1 + $0x14] sm:$0xf]
  %v30 = vld [vmem:[%s1 + $0x1c] sm:$0xf]
  %v31 = vld [vmem:[%s2] sm:$0xf]
  %v32 = vld [vmem:[%s2 + $0x4] sm:$0xf]
  %v33 = vld [vmem:[%s2 + $0x8] sm:$0xf]
  %v34 = vld [vmem:[%s2 + $0xc] sm:$0xf]
  %v35 = vld [vmem:[%s2 + $0x10] sm:$0xf]
  %v36 = vld [vmem:[%s2 + $0x14] sm:$0xf]
  %v37 = vld [vmem:[%s2 + $0x18] sm:$0xf]
  %v38 = vld [vmem:[%s2 + $0x1c] sm:$0xf]
  %v39 = vld [vmem:[%s2 + $0x20] sm:$0xf]
  %v40 = vld [vmem:[%s2 + $0x24] sm:$0xf]
  %v41 = vld [vmem:[%s2 + $0x28] sm:$0xf]
  %v42 = vld [vmem:[%s2 + $0x2c] sm:$0xf]
  %v43 = vld [vmem:[%s2 + $0x30] sm:$0xf]
  %v44 = vld [vmem:[%s2 + $0x34] sm:$0xf]
  %v45 = vld [vmem:[%s2 + $0x38] sm:$0xf]
  %v46 = vld [vmem:[%s2 + $0x3c] sm:$0xf]
  %v47 = vld [vmem:[%s3 + $0x8] sm:$0x1]
  %v48 = vld [vmem:[%s3 + $0x9] sm:$0x1]
  %v49 = vld [vmem:[%s3 + $0xa] sm:$0x1]
  %v50 = vld [vmem:[%s3 + $0xb] sm:$0x1]
  %v51 = vld [vmem:[%s3 + $0xc] sm:$0x1]
  %v52 = vld [vmem:[%s3 + $0xd] sm:$0x1]
  %v53 = vld [vmem:[%s3 + $0xe] sm:$0x1]
  %v54 = vld [vmem:[%s3 + $0xf] sm:$0x1]
  %v55 = vpack.c.bf16 %v22, %v21
  %v56 = vperm.slane %v47, 0
  %v61 = vunpack.c.l.b16 %v23
  %v62 = vunpack.c.l.b16 %v24
  %v63 = vunpack.c.l.b16 %v25
  %v64 = vunpack.c.l.b16 %v26
  %v65 = vpack.c.b16 %v62, %v61
  %v66 = vpack.c.b16 %v64, %v63
  %vm69 = vcmask 261120
  %v71 = vsel %vm69, %v55, 0
  %73 = vmatpush.bf16.msra.mxu0 0
  %74 = vmatpush.bf16.msra.mxu0 0
  %75 = vmatpush.bf16.msra.mxu0 0
  %76 = vmatpush.bf16.msra.mxu0 0
  %77 = vmatpush.bf16.msra.mxu0 0
  %78 = vmatpush.bf16.msra.mxu0 0
  %79 = vmatpush.bf16.msra.mxu0 %v66
  %80 = vmatpush.bf16.msra.mxu0 %v65
  %81 = vmatmul.bf16.gmra.mxu0 %v71
  %v82 = vpop.f32.mrf.mxu0
  %v83 = vadd.f32 %v56, %v82
  %v84 = vpop.f32.mrf.mxu0
  %v85 = vadd.f32 %v56, %v84
  %86 = vdwg.mxu0
  %v87 = vpack.c.bf16 %v83, %v83
  %v88 = vpack.c.bf16 %v85, %v85
  %v90 = vunpack.c.l.b16 %v87
  %v91 = vpack.c.b16 %v90, %v90
  %92 = vrot.lane.b32.xlu0 %v91, 96
  %v93 = vpop.permute.xlu0 %92
  %vm94 = vcmask 64512
  %v96 = vsel %vm94, %v87, 0
  %v99 = vsel %vm94, %v93, 0
  %101 = vmatpush.bf16.xpose.msra.mxu0 0
  %102 = vmatpush.bf16.xpose.msra.mxu0 0
  %103 = vmatpush.bf16.xpose.msra.mxu0 0
  %104 = vmatpush.bf16.xpose.msra.mxu0 0
  %105 = vmatpush.bf16.xpose.msra.mxu0 0
  %106 = vmatpush.bf16.xpose.msra.mxu0 0
  %107 = vmatpush.bf16.xpose.msra.mxu0 0
  %108 = vmatpush.bf16.xpose.msra.mxu0 %v99
  %109 = vmatmul.bf16.gmra.mxu0 %v96
  %v110 = vpop.f32.mrf.mxu0
  %v111 = vadd.f32 0.0, %v110
  %v112 = vpop.f32.mrf.mxu0
  %113 = vdwg.mxu0
  %v115 = vunpack.c.l.b16 %v88
  %v116 = vpack.c.b16 %v115, %v115
  %117 = vrot.lane.b32.xlu0 %v116, 96
  %v118 = vpop.permute.xlu0 %117
  %v120 = vsel %vm94, %v88, 0
  %v123 = vsel %vm94, %v118, 0
  %125 = vmatpush.bf16.xpose.msra.mxu0 0
  %126 = vmatpush.bf16.xpose.msra.mxu0 0
  %127 = vmatpush.bf16.xpose.msra.mxu0 0
  %128 = vmatpush.bf16.xpose.msra.mxu0 0
  %129 = vmatpush.bf16.xpose.msra.mxu0 0
  %130 = vmatpush.bf16.xpose.msra.mxu0 0
  %131 = vmatpush.bf16.xpose.msra.mxu0 0
  %132 = vmatpush.bf16.xpose.msra.mxu0 %v123
  %133 = vmatmul.bf16.gmra.mxu0 %v120
  %v134 = vpop.f32.mrf.mxu0
  %v135 = vadd.f32 0.0, %v134
  %v136 = vpop.f32.mrf.mxu0
  %137 = vdwg.mxu0
  %v138 = vsel %vm94, %v111, -inf
  %139 = vmax.xlane.f32.xlu0 %v138
  %v140 = vpop.xlane.xlu0 %139
  %v141 = vsel %vm94, %v135, -inf
  %142 = vmax.xlane.f32.xlu0 %v141
  %v143 = vpop.xlane.xlu0 %142
  %v144 = vsub.f32 %v111, %v140
  %v145 = vsub.f32 %v135, %v143
  %v146 = vmul.f32 %v144, 1.442695
  %v147 = vpow.pop %v146
  %v148 = vmul.f32 %v145, 1.442695
  %v149 = vpow.pop %v148
  %v150 = vsel %vm94, %v147, 0.0
  %151 = vadd.xlane.f32.xlu0 %v150
  %v152 = vpop.xlane.xlu0 %151
  %v153 = vsel %vm94, %v149, 0.0
  %154 = vadd.xlane.f32.xlu0 %v153
  %v155 = vpop.xlane.xlu0 %154
  %v156 = vrcp.pop %v152
  %v157 = vrcp.pop %v155
  %v158 = vmul.f32 %v147, %v156
  %v159 = vmul.f32 %v149, %v157
  %v160 = vpack.c.bf16 %v158, %v158
  %v161 = vpack.c.bf16 %v159, %v159
  %162 = vrot.lane.b32.xlu0 %v91, 64
  %v163 = vpop.permute.xlu0 %162
  %v165 = vsel %vm94, %v160, 0
  %vm167 = vcmask 1043456
  %v169 = vsel %vm167, %v163, 0
  %171 = vmatpush.bf16.msra.mxu0 0
  %172 = vmatpush.bf16.msra.mxu0 0
  %173 = vmatpush.bf16.msra.mxu0 0
  %174 = vmatpush.bf16.msra.mxu0 0
  %175 = vmatpush.bf16.msra.mxu0 0
  %176 = vmatpush.bf16.msra.mxu0 0
  %177 = vmatpush.bf16.msra.mxu0 0
  %178 = vmatpush.bf16.msra.mxu0 %v169
  %179 = vmatmul.bf16.gmra.mxu0 %v165
  %v180 = vpop.f32.mrf.mxu0
  %v181 = vadd.f32 0.0, %v180
  %v182 = vpop.f32.mrf.mxu0
  %183 = vdwg.mxu0
  %184 = vrot.lane.b32.xlu0 %v116, 64
  %v185 = vpop.permute.xlu0 %184
  %v187 = vsel %vm94, %v161, 0
  %v190 = vsel %vm167, %v185, 0
  %192 = vmatpush.bf16.msra.mxu0 0
  %193 = vmatpush.bf16.msra.mxu0 0
  %194 = vmatpush.bf16.msra.mxu0 0
  %195 = vmatpush.bf16.msra.mxu0 0
  %196 = vmatpush.bf16.msra.mxu0 0
  %197 = vmatpush.bf16.msra.mxu0 0
  %198 = vmatpush.bf16.msra.mxu0 0
  %199 = vmatpush.bf16.msra.mxu0 %v190
  %200 = vmatmul.bf16.gmra.mxu0 %v187
  %v201 = vpop.f32.mrf.mxu0
  %v202 = vadd.f32 0.0, %v201
  %v203 = vpop.f32.mrf.mxu0
  %204 = vdwg.mxu0
  %205 = vrot.lane.b32.xlu0 %v91, 120
  %v206 = vpop.permute.xlu0 %205
  %207 = vrot.lane.b32.xlu0 %v91, 88
  %v208 = vpop.permute.xlu0 %207
  %v210 = vsel %vm94, %v206, 0
  %v213 = vsel %vm94, %v208, 0
  %215 = vmatpush.bf16.xpose.msra.mxu0 0
  %216 = vmatpush.bf16.xpose.msra.mxu0 0
  %217 = vmatpush.bf16.xpose.msra.mxu0 0
  %218 = vmatpush.bf16.xpose.msra.mxu0 0
  %219 = vmatpush.bf16.xpose.msra.mxu0 0
  %220 = vmatpush.bf16.xpose.msra.mxu0 0
  %221 = vmatpush.bf16.xpose.msra.mxu0 0
  %222 = vmatpush.bf16.xpose.msra.mxu0 %v213
  %223 = vmatmul.bf16.gmra.mxu0 %v210
  %v224 = vpop.f32.mrf.mxu0
  %v225 = vadd.f32 0.0, %v224
  %v226 = vpop.f32.mrf.mxu0
  %227 = vdwg.mxu0
  %228 = vrot.lane.b32.xlu0 %v116, 120
  %v229 = vpop.permute.xlu0 %228
  %230 = vrot.lane.b32.xlu0 %v116, 88
  %v231 = vpop.permute.xlu0 %230
  %v233 = vsel %vm94, %v229, 0
  %v236 = vsel %vm94, %v231, 0
  %238 = vmatpush.bf16.xpose.msra.mxu0 0
  %239 = vmatpush.bf16.xpose.msra.mxu0 0
  %240 = vmatpush.bf16.xpose.msra.mxu0 0
  %241 = vmatpush.bf16.xpose.msra.mxu0 0
  %242 = vmatpush.bf16.xpose.msra.mxu0 0
  %243 = vmatpush.bf16.xpose.msra.mxu0 0
  %244 = vmatpush.bf16.xpose.msra.mxu0 0
  %245 = vmatpush.bf16.xpose.msra.mxu0 %v236
  %246 = vmatmul.bf16.gmra.mxu0 %v233
  %v247 = vpop.f32.mrf.mxu0
  %v248 = vadd.f32 0.0, %v247
  %v249 = vpop.f32.mrf.mxu0
  %250 = vdwg.mxu0
  %v251 = vsel %vm94, %v225, -inf
  %252 = vmax.xlane.f32.xlu0 %v251
  %v253 = vpop.xlane.xlu0 %252
  %v254 = vsel %vm94, %v248, -inf
  %255 = vmax.xlane.f32.xlu0 %v254
  %v256 = vpop.xlane.xlu0 %255
  %v257 = vsub.f32 %v225, %v253
  %v258 = vsub.f32 %v248, %v256
  %v259 = vmul.f32 %v257, 1.442695
  %v260 = vpow.pop %v259
  %v261 = vmul.f32 %v258, 1.442695
  %v262 = vpow.pop %v261
  %v263 = vsel %vm94, %v260, 0.0
  %264 = vadd.xlane.f32.xlu0 %v263
  %v265 = vpop.xlane.xlu0 %264
  %v266 = vsel %vm94, %v262, 0.0
  %267 = vadd.xlane.f32.xlu0 %v266
  %v268 = vpop.xlane.xlu0 %267
  %v269 = vrcp.pop %v265
  %v270 = vrcp.pop %v268
  %v271 = vmul.f32 %v260, %v269
  %v272 = vmul.f32 %v262, %v270
  %v273 = vpack.c.bf16 %v271, %v271
  %v274 = vpack.c.bf16 %v272, %v272
  %275 = vrot.lane.b32.xlu0 %v91, 56
  %v276 = vpop.permute.xlu0 %275
  %v278 = vsel %vm94, %v273, 0
  %v281 = vsel %vm167, %v276, 0
  %283 = vmatpush.bf16.msra.mxu0 0
  %284 = vmatpush.bf16.msra.mxu0 0
  %285 = vmatpush.bf16.msra.mxu0 0
  %286 = vmatpush.bf16.msra.mxu0 0
  %287 = vmatpush.bf16.msra.mxu0 0
  %288 = vmatpush.bf16.msra.mxu0 0
  %289 = vmatpush.bf16.msra.mxu0 0
  %290 = vmatpush.bf16.msra.mxu0 %v281
  %291 = vmatmul.bf16.gmra.mxu0 %v278
  %v292 = vpop.f32.mrf.mxu0
  %v293 = vadd.f32 0.0, %v292
  %v294 = vpop.f32.mrf.mxu0
  %295 = vdwg.mxu0
  %296 = vrot.lane.b32.xlu0 %v116, 56
  %v297 = vpop.permute.xlu0 %296
  %v299 = vsel %vm94, %v274, 0
  %v302 = vsel %vm167, %v297, 0
  %304 = vmatpush.bf16.msra.mxu0 0
  %305 = vmatpush.bf16.msra.mxu0 0
  %306 = vmatpush.bf16.msra.mxu0 0
  %307 = vmatpush.bf16.msra.mxu0 0
  %308 = vmatpush.bf16.msra.mxu0 0
  %309 = vmatpush.bf16.msra.mxu0 0
  %310 = vmatpush.bf16.msra.mxu0 0
  %311 = vmatpush.bf16.msra.mxu0 %v302
  %312 = vmatmul.bf16.gmra.mxu0 %v299
  %v313 = vpop.f32.mrf.mxu0
  %v314 = vadd.f32 0.0, %v313
  %v315 = vpop.f32.mrf.mxu0
  %316 = vdwg.mxu0
  %317 = vrot.lane.b32.xlu0 %v91, 112
  %v318 = vpop.permute.xlu0 %317
  %319 = vrot.lane.b32.xlu0 %v91, 80
  %v320 = vpop.permute.xlu0 %319
  %v322 = vsel %vm94, %v318, 0
  %v325 = vsel %vm94, %v320, 0
  %327 = vmatpush.bf16.xpose.msra.mxu0 0
  %328 = vmatpush.bf16.xpose.msra.mxu0 0
  %329 = vmatpush.bf16.xpose.msra.mxu0 0
  %330 = vmatpush.bf16.xpose.msra.mxu0 0
  %331 = vmatpush.bf16.xpose.msra.mxu0 0
  %332 = vmatpush.bf16.xpose.msra.mxu0 0
  %333 = vmatpush.bf16.xpose.msra.mxu0 0
  %334 = vmatpush.bf16.xpose.msra.mxu0 %v325
  %335 = vmatmul.bf16.gmra.mxu0 %v322
  %v336 = vpop.f32.mrf.mxu0
  %v337 = vadd.f32 0.0, %v336
  %v338 = vpop.f32.mrf.mxu0
  %339 = vdwg.mxu0
  %340 = vrot.lane.b32.xlu0 %v116, 112
  %v341 = vpop.permute.xlu0 %340
  %342 = vrot.lane.b32.xlu0 %v116, 80
  %v343 = vpop.permute.xlu0 %342
  %v345 = vsel %vm94, %v341, 0
  %v348 = vsel %vm94, %v343, 0
  %350 = vmatpush.bf16.xpose.msra.mxu0 0
  %351 = vmatpush.bf16.xpose.msra.mxu0 0
  %352 = vmatpush.bf16.xpose.msra.mxu0 0
  %353 = vmatpush.bf16.xpose.msra.mxu0 0
  %354 = vmatpush.bf16.xpose.msra.mxu0 0
  %355 = vmatpush.bf16.xpose.msra.mxu0 0
  %356 = vmatpush.bf16.xpose.msra.mxu0 0
  %357 = vmatpush.bf16.xpose.msra.mxu0 %v348
  %358 = vmatmul.bf16.gmra.mxu0 %v345
  %v359 = vpop.f32.mrf.mxu0
  %v360 = vadd.f32 0.0, %v359
  %v361 = vpop.f32.mrf.mxu0
  %362 = vdwg.mxu0
  %v363 = vsel %vm94, %v337, -inf
  %364 = vmax.xlane.f32.xlu0 %v363
  %v365 = vpop.xlane.xlu0 %364
  %v366 = vsel %vm94, %v360, -inf
  %367 = vmax.xlane.f32.xlu0 %v366
  %v368 = vpop.xlane.xlu0 %367
  %v369 = vsub.f32 %v337, %v365
  %v370 = vsub.f32 %v360, %v368
  %v371 = vmul.f32 %v369, 1.442695
  %v372 = vpow.pop %v371
  %v373 = vmul.f32 %v370, 1.442695
  %v374 = vpow.pop %v373
  %v375 = vsel %vm94, %v372, 0.0
  %376 = vadd.xlane.f32.xlu0 %v375
  %v377 = vpop.xlane.xlu0 %376
  %v378 = vsel %vm94, %v374, 0.0
  %379 = vadd.xlane.f32.xlu0 %v378
  %v380 = vpop.xlane.xlu0 %379
  %v381 = vrcp.pop %v377
  %v382 = vrcp.pop %v380
  %v383 = vmul.f32 %v372, %v381
  %v384 = vmul.f32 %v374, %v382
  %v385 = vpack.c.bf16 %v383, %v383
  %v386 = vpack.c.bf16 %v384, %v384
  %387 = vrot.lane.b32.xlu0 %v91, 48
  %v388 = vpop.permute.xlu0 %387
  %v390 = vsel %vm94, %v385, 0
  %v393 = vsel %vm167, %v388, 0
  %395 = vmatpush.bf16.msra.mxu0 0
  %396 = vmatpush.bf16.msra.mxu0 0
  %397 = vmatpush.bf16.msra.mxu0 0
  %398 = vmatpush.bf16.msra.mxu0 0
  %399 = vmatpush.bf16.msra.mxu0 0
  %400 = vmatpush.bf16.msra.mxu0 0
  %401 = vmatpush.bf16.msra.mxu0 0
  %402 = vmatpush.bf16.msra.mxu0 %v393
  %403 = vmatmul.bf16.gmra.mxu0 %v390
  %v404 = vpop.f32.mrf.mxu0
  %v405 = vadd.f32 0.0, %v404
  %v406 = vpop.f32.mrf.mxu0
  %407 = vdwg.mxu0
  %408 = vrot.lane.b32.xlu0 %v116, 48
  %v409 = vpop.permute.xlu0 %408
  %v411 = vsel %vm94, %v386, 0
  %v414 = vsel %vm167, %v409, 0
  %416 = vmatpush.bf16.msra.mxu0 0
  %417 = vmatpush.bf16.msra.mxu0 0
  %418 = vmatpush.bf16.msra.mxu0 0
  %419 = vmatpush.bf16.msra.mxu0 0
  %420 = vmatpush.bf16.msra.mxu0 0
  %421 = vmatpush.bf16.msra.mxu0 0
  %422 = vmatpush.bf16.msra.mxu0 0
  %423 = vmatpush.bf16.msra.mxu0 %v414
  %424 = vmatmul.bf16.gmra.mxu0 %v411
  %v425 = vpop.f32.mrf.mxu0
  %v426 = vadd.f32 0.0, %v425
  %v427 = vpop.f32.mrf.mxu0
  %428 = vdwg.mxu0
  %429 = vrot.lane.b32.xlu0 %v91, 104
  %v430 = vpop.permute.xlu0 %429
  %431 = vrot.lane.b32.xlu0 %v91, 72
  %v432 = vpop.permute.xlu0 %431
  %v434 = vsel %vm94, %v430, 0
  %v437 = vsel %vm94, %v432, 0
  %439 = vmatpush.bf16.xpose.msra.mxu0 0
  %440 = vmatpush.bf16.xpose.msra.mxu0 0
  %441 = vmatpush.bf16.xpose.msra.mxu0 0
  %442 = vmatpush.bf16.xpose.msra.mxu0 0
  %443 = vmatpush.bf16.xpose.msra.mxu0 0
  %444 = vmatpush.bf16.xpose.msra.mxu0 0
  %445 = vmatpush.bf16.xpose.msra.mxu0 0
  %446 = vmatpush.bf16.xpose.msra.mxu0 %v437
  %447 = vmatmul.bf16.gmra.mxu0 %v434
  %v448 = vpop.f32.mrf.mxu0
  %v449 = vadd.f32 0.0, %v448
  %v450 = vpop.f32.mrf.mxu0
  %451 = vdwg.mxu0
  %452 = vrot.lane.b32.xlu0 %v116, 104
  %v453 = vpop.permute.xlu0 %452
  %454 = vrot.lane.b32.xlu0 %v116, 72
  %v455 = vpop.permute.xlu0 %454
  %v457 = vsel %vm94, %v453, 0
  %v460 = vsel %vm94, %v455, 0
  %462 = vmatpush.bf16.xpose.msra.mxu0 0
  %463 = vmatpush.bf16.xpose.msra.mxu0 0
  %464 = vmatpush.bf16.xpose.msra.mxu0 0
  %465 = vmatpush.bf16.xpose.msra.mxu0 0
  %466 = vmatpush.bf16.xpose.msra.mxu0 0
  %467 = vmatpush.bf16.xpose.msra.mxu0 0
  %468 = vmatpush.bf16.xpose.msra.mxu0 0
  %469 = vmatpush.bf16.xpose.msra.mxu0 %v460
  %470 = vmatmul.bf16.gmra.mxu0 %v457
  %v471 = vpop.f32.mrf.mxu0
  %v472 = vadd.f32 0.0, %v471
  %v473 = vpop.f32.mrf.mxu0
  %474 = vdwg.mxu0
  %v475 = vsel %vm94, %v449, -inf
  %476 = vmax.xlane.f32.xlu0 %v475
  %v477 = vpop.xlane.xlu0 %476
  %v478 = vsel %vm94, %v472, -inf
  %479 = vmax.xlane.f32.xlu0 %v478
  %v480 = vpop.xlane.xlu0 %479
  %v481 = vsub.f32 %v449, %v477
  %v482 = vsub.f32 %v472, %v480
  %v483 = vmul.f32 %v481, 1.442695
  %v484 = vpow.pop %v483
  %v485 = vmul.f32 %v482, 1.442695
  %v486 = vpow.pop %v485
  %v487 = vsel %vm94, %v484, 0.0
  %488 = vadd.xlane.f32.xlu0 %v487
  %v489 = vpop.xlane.xlu0 %488
  %v490 = vsel %vm94, %v486, 0.0
  %491 = vadd.xlane.f32.xlu0 %v490
  %v492 = vpop.xlane.xlu0 %491
  %v493 = vrcp.pop %v489
  %v494 = vrcp.pop %v492
  %v495 = vmul.f32 %v484, %v493
  %v496 = vmul.f32 %v486, %v494
  %v497 = vpack.c.bf16 %v495, %v495
  %v498 = vpack.c.bf16 %v496, %v496
  %499 = vrot.lane.b32.xlu0 %v91, 40
  %v500 = vpop.permute.xlu0 %499
  %v502 = vsel %vm94, %v497, 0
  %v505 = vsel %vm167, %v500, 0
  %507 = vmatpush.bf16.msra.mxu0 0
  %508 = vmatpush.bf16.msra.mxu0 0
  %509 = vmatpush.bf16.msra.mxu0 0
  %510 = vmatpush.bf16.msra.mxu0 0
  %511 = vmatpush.bf16.msra.mxu0 0
  %512 = vmatpush.bf16.msra.mxu0 0
  %513 = vmatpush.bf16.msra.mxu0 0
  %514 = vmatpush.bf16.msra.mxu0 %v505
  %515 = vmatmul.bf16.gmra.mxu0 %v502
  %v516 = vpop.f32.mrf.mxu0
  %v517 = vadd.f32 0.0, %v516
  %v518 = vpop.f32.mrf.mxu0
  %519 = vdwg.mxu0
  %520 = vrot.lane.b32.xlu0 %v116, 40
  %v521 = vpop.permute.xlu0 %520
  %v523 = vsel %vm94, %v498, 0
  %v526 = vsel %vm167, %v521, 0
  %528 = vmatpush.bf16.msra.mxu0 0
  %529 = vmatpush.bf16.msra.mxu0 0
  %530 = vmatpush.bf16.msra.mxu0 0
  %531 = vmatpush.bf16.msra.mxu0 0
  %532 = vmatpush.bf16.msra.mxu0 0
  %533 = vmatpush.bf16.msra.mxu0 0
  %534 = vmatpush.bf16.msra.mxu0 0
  %535 = vmatpush.bf16.msra.mxu0 %v526
  %536 = vmatmul.bf16.gmra.mxu0 %v523
  %v537 = vpop.f32.mrf.mxu0
  %v538 = vadd.f32 0.0, %v537
  %v539 = vpop.f32.mrf.mxu0
  %540 = vdwg.mxu0
  %543 = vrot.lane.b32.xlu0 %v293, 8
  %v544 = vpop.permute.xlu0 %543
  %545 = vrot.lane.b32.xlu0 %v314, 8
  %v546 = vpop.permute.xlu0 %545
  %551 = vrot.lane.b32.xlu0 %v405, 16
  %v552 = vpop.permute.xlu0 %551
  %553 = vrot.lane.b32.xlu0 %v426, 16
  %v554 = vpop.permute.xlu0 %553
  %559 = vrot.lane.b32.xlu0 %v517, 24
  %v560 = vpop.permute.xlu0 %559
  %561 = vrot.lane.b32.xlu0 %v538, 24
  %v562 = vpop.permute.xlu0 %561
  %v565 = vsel %vm94, %v181, %v544
  %v566 = vsel %vm94, %v202, %v546
  %vm567 = vcmask 130048
  %v568 = vsel %vm567, %v565, %v552
  %v569 = vsel %vm567, %v566, %v554
  %vm570 = vcmask 195584
  %v571 = vsel %vm570, %v568, %v560
  %v572 = vsel %vm570, %v569, %v562
  %v573 = vpack.c.bf16 %v572, %v571
  %v574 = vperm.slane %v48, 0
  %575 = vrot.lane.b32.xlu0 %v65, 32
  %v576 = vpop.permute.xlu0 %575
  %577 = vrot.lane.b32.xlu0 %v66, 32
  %v578 = vpop.permute.xlu0 %577
  %v582 = vsel %vm69, %v573, 0
  %584 = vmatpush.bf16.msra.mxu0 0
  %585 = vmatpush.bf16.msra.mxu0 0
  %586 = vmatpush.bf16.msra.mxu0 0
  %587 = vmatpush.bf16.msra.mxu0 0
  %588 = vmatpush.bf16.msra.mxu0 0
  %589 = vmatpush.bf16.msra.mxu0 0
  %590 = vmatpush.bf16.msra.mxu0 %v578
  %591 = vmatpush.bf16.msra.mxu0 %v576
  %592 = vmatmul.bf16.gmra.mxu0 %v582
  %v593 = vpop.f32.mrf.mxu0
  %v594 = vadd.f32 %v574, %v593
  %v595 = vpop.f32.mrf.mxu0
  %v596 = vadd.f32 %v574, %v595
  %597 = vdwg.mxu0
  %v598 = vadd.f32 %v21, %v594
  %v599 = vadd.f32 %v22, %v596
  %v600 = vsel %vm69, %v598, 0.0
  %601 = vadd.xlane.f32.xlu0 %v600
  %v602 = vpop.xlane.xlu0 %601
  %v603 = vsel %vm69, %v599, 0.0
  %604 = vadd.xlane.f32.xlu0 %v603
  %v605 = vpop.xlane.xlu0 %604
  %v606 = vrcp.pop 32.0
  %v607 = vmul.f32 32.0, %v606
  %v608 = vsub.f32 1.0, %v607
  %v609 = vmul.f32 %v606, %v608
  %v610 = vadd.f32 %v606, %v609
  %vm611 = vweird.f32 %v606
  %v612 = vsel %vm611, %v606, %v610
  %v613 = vmul.f32 %v602, %v612
  %v614 = vmul.f32 %v605, %v612
  %v615 = vsub.f32 %v598, %v613
  %v616 = vsub.f32 %v599, %v614
  %v617 = vmul.f32 %v615, %v615
  %v618 = vmul.f32 %v616, %v616
  %v619 = vsel %vm69, %v617, 0.0
  %620 = vadd.xlane.f32.xlu0 %v619
  %v621 = vpop.xlane.xlu0 %620
  %v622 = vsel %vm69, %v618, 0.0
  %623 = vadd.xlane.f32.xlu0 %v622
  %v624 = vpop.xlane.xlu0 %623
  %v625 = vmul.f32 %v621, %v612
  %v626 = vmul.f32 %v624, %v612
  %v627 = vadd.f32 %v625, 1e-05
  %v628 = vadd.f32 %v626, 1e-05
  %v629 = vrsqrt.pop %v627
  %v630 = vmul.f32 %v629, %v627
  %v631 = vmul.f32 %v630, %v629
  %v632 = vmul.f32 0.5, %v631
  %v633 = vsub.f32 1.5, %v632
  %v634 = vmul.f32 %v629, %v633
  %vm635 = vweird.f32 %v627
  %vm636 = vweird.f32 %v629
  %vm637 = vmor %vm635, %vm636
  %v638 = vsel %vm637, %v629, %v634
  %v639 = vrsqrt.pop %v628
  %v640 = vmul.f32 %v639, %v628
  %v641 = vmul.f32 %v640, %v639
  %v642 = vmul.f32 0.5, %v641
  %v643 = vsub.f32 1.5, %v642
  %v644 = vmul.f32 %v639, %v643
  %vm645 = vweird.f32 %v628
  %vm646 = vweird.f32 %v639
  %vm647 = vmor %vm645, %vm646
  %v648 = vsel %vm647, %v639, %v644
  %v649 = vmul.f32 %v615, %v638
  %v650 = vmul.f32 %v616, %v648
  %v651 = vperm.slane %v49, 0
  %v652 = vmul.f32 %v649, %v651
  %v653 = vmul.f32 %v650, %v651
  %v654 = vperm.slane %v50, 0
  %v655 = vadd.f32 %v652, %v654
  %v656 = vadd.f32 %v653, %v654
  %v657 = vpack.c.bf16 %v656, %v655
  %v658 = vperm.slane %v51, 0
  %v663 = vunpack.c.l.b16 %v27
  %v664 = vunpack.c.l.b16 %v28
  %v665 = vunpack.c.l.b16 %v29
  %v666 = vunpack.c.l.b16 %v30
  %v667 = vpack.c.b16 %v664, %v663
  %v668 = vpack.c.b16 %v666, %v665
  %v672 = vsel %vm69, %v657, 0
  %674 = vmatpush.bf16.msra.mxu0 0
  %675 = vmatpush.bf16.msra.mxu0 0
  %676 = vmatpush.bf16.msra.mxu0 0
  %677 = vmatpush.bf16.msra.mxu0 0
  %678 = vmatpush.bf16.msra.mxu0 0
  %679 = vmatpush.bf16.msra.mxu0 0
  %680 = vmatpush.bf16.msra.mxu0 %v668
  %681 = vmatpush.bf16.msra.mxu0 %v667
  %682 = vmatmul.bf16.gmra.mxu0 %v672
  %v683 = vpop.f32.mrf.mxu0
  %v684 = vadd.f32 %v658, %v683
  %v685 = vpop.f32.mrf.mxu0
  %v686 = vadd.f32 %v658, %v685
  %687 = vdwg.mxu0
  %v688 = vmax.f32 %v684, 0.0
  %v689 = vmax.f32 %v686, 0.0
  %v690 = vpack.c.bf16 %v689, %v688
  %v691 = vperm.slane %v52, 0
  %v708 = vunpack.c.l.b16 %v31
  %v709 = vunpack.c.l.b16 %v32
  %v710 = vunpack.c.l.b16 %v33
  %v711 = vunpack.c.l.b16 %v34
  %v712 = vunpack.c.l.b16 %v35
  %v713 = vunpack.c.l.b16 %v36
  %v714 = vunpack.c.l.b16 %v37
  %v715 = vunpack.c.l.b16 %v38
  %v716 = vunpack.c.l.b16 %v39
  %v717 = vunpack.c.l.b16 %v40
  %v718 = vunpack.c.l.b16 %v41
  %v719 = vunpack.c.l.b16 %v42
  %v720 = vunpack.c.l.b16 %v43
  %v721 = vunpack.c.l.b16 %v44
  %v722 = vunpack.c.l.b16 %v45
  %v723 = vunpack.c.l.b16 %v46
  %v724 = vpack.c.b16 %v709, %v708
  %v725 = vpack.c.b16 %v711, %v710
  %v726 = vpack.c.b16 %v713, %v712
  %v727 = vpack.c.b16 %v715, %v714
  %v728 = vpack.c.b16 %v717, %v716
  %v729 = vpack.c.b16 %v719, %v718
  %v730 = vpack.c.b16 %v721, %v720
  %v731 = vpack.c.b16 %v723, %v722
  %740 = vmatpush.bf16.msra.mxu0 %v731
  %741 = vmatpush.bf16.msra.mxu0 %v730
  %742 = vmatpush.bf16.msra.mxu0 %v729
  %743 = vmatpush.bf16.msra.mxu0 %v728
  %744 = vmatpush.bf16.msra.mxu0 %v727
  %745 = vmatpush.bf16.msra.mxu0 %v726
  %746 = vmatpush.bf16.msra.mxu0 %v725
  %747 = vmatpush.bf16.msra.mxu0 %v724
  %748 = vmatmul.bf16.gmra.mxu0 %v690
  %v749 = vpop.f32.mrf.mxu0
  %v750 = vadd.f32 %v691, %v749
  %v751 = vpop.f32.mrf.mxu0
  %v752 = vadd.f32 %v691, %v751
  %753 = vdwg.mxu0
  %v754 = vadd.f32 %v655, %v750
  %v755 = vadd.f32 %v656, %v752
  %v756 = vsel %vm69, %v754, 0.0
  %757 = vadd.xlane.f32.xlu0 %v756
  %v758 = vpop.xlane.xlu0 %757
  %v759 = vsel %vm69, %v755, 0.0
  %760 = vadd.xlane.f32.xlu0 %v759
  %v761 = vpop.xlane.xlu0 %760
  %v762 = vmul.f32 %v758, %v612
  %v763 = vmul.f32 %v761, %v612
  %v764 = vsub.f32 %v754, %v762
  %v765 = vsub.f32 %v755, %v763
  %v766 = vmul.f32 %v764, %v764
  %v767 = vmul.f32 %v765, %v765
  %v768 = vsel %vm69, %v766, 0.0
  %769 = vadd.xlane.f32.xlu0 %v768
  %v770 = vpop.xlane.xlu0 %769
  %v771 = vsel %vm69, %v767, 0.0
  %772 = vadd.xlane.f32.xlu0 %v771
  %v773 = vpop.xlane.xlu0 %772
  %v774 = vmul.f32 %v770, %v612
  %v775 = vmul.f32 %v773, %v612
  %v776 = vadd.f32 %v774, 1e-05
  %v777 = vadd.f32 %v775, 1e-05
  %v778 = vrsqrt.pop %v776
  %v779 = vmul.f32 %v778, %v776
  %v780 = vmul.f32 %v779, %v778
  %v781 = vmul.f32 0.5, %v780
  %v782 = vsub.f32 1.5, %v781
  %v783 = vmul.f32 %v778, %v782
  %vm784 = vweird.f32 %v776
  %vm785 = vweird.f32 %v778
  %vm786 = vmor %vm784, %vm785
  %v787 = vsel %vm786, %v778, %v783
  %v788 = vrsqrt.pop %v777
  %v789 = vmul.f32 %v788, %v777
  %v790 = vmul.f32 %v789, %v788
  %v791 = vmul.f32 0.5, %v790
  %v792 = vsub.f32 1.5, %v791
  %v793 = vmul.f32 %v788, %v792
  %vm794 = vweird.f32 %v777
  %vm795 = vweird.f32 %v788
  %vm796 = vmor %vm794, %vm795
  %v797 = vsel %vm796, %v788, %v793
  %v798 = vmul.f32 %v764, %v787
  %v799 = vmul.f32 %v765, %v797
  %v800 = vperm.slane %v53, 0
  %v801 = vmul.f32 %v798, %v800
  %v802 = vmul.f32 %v799, %v800
  %v803 = vperm.slane %v54, 0
  %v804 = vadd.f32 %v801, %v803
  %v805 = vadd.f32 %v802, %v803
  %s806 = scalar_lea.vmem %s1, 32
  %v807 = vld [vmem:[%s806] sm:$0xf]
  %v808 = vld [vmem:[%s806 + $0x8] sm:$0xf]
  %v809 = vld [vmem:[%s806 + $0x10] sm:$0xf]
  %v810 = vld [vmem:[%s806 + $0x18] sm:$0xf]
  %v811 = vld [vmem:[%s806 + $0x4] sm:$0xf]
  %v812 = vld [vmem:[%s806 + $0xc] sm:$0xf]
  %v813 = vld [vmem:[%s806 + $0x14] sm:$0xf]
  %v814 = vld [vmem:[%s806 + $0x1c] sm:$0xf]
  %s815 = scalar_lea.vmem %s2, 64
  %v816 = vld [vmem:[%s815] sm:$0xf]
  %v817 = vld [vmem:[%s815 + $0x4] sm:$0xf]
  %v818 = vld [vmem:[%s815 + $0x8] sm:$0xf]
  %v819 = vld [vmem:[%s815 + $0xc] sm:$0xf]
  %v820 = vld [vmem:[%s815 + $0x10] sm:$0xf]
  %v821 = vld [vmem:[%s815 + $0x14] sm:$0xf]
  %v822 = vld [vmem:[%s815 + $0x18] sm:$0xf]
  %v823 = vld [vmem:[%s815 + $0x1c] sm:$0xf]
  %v824 = vld [vmem:[%s815 + $0x20] sm:$0xf]
  %v825 = vld [vmem:[%s815 + $0x24] sm:$0xf]
  %v826 = vld [vmem:[%s815 + $0x28] sm:$0xf]
  %v827 = vld [vmem:[%s815 + $0x2c] sm:$0xf]
  %v828 = vld [vmem:[%s815 + $0x30] sm:$0xf]
  %v829 = vld [vmem:[%s815 + $0x34] sm:$0xf]
  %v830 = vld [vmem:[%s815 + $0x38] sm:$0xf]
  %v831 = vld [vmem:[%s815 + $0x3c] sm:$0xf]
  %v832 = vld [vmem:[%s3 + $0x10] sm:$0x1]
  %v833 = vld [vmem:[%s3 + $0x11] sm:$0x1]
  %v834 = vld [vmem:[%s3 + $0x12] sm:$0x1]
  %v835 = vld [vmem:[%s3 + $0x13] sm:$0x1]
  %v836 = vld [vmem:[%s3 + $0x14] sm:$0x1]
  %v837 = vld [vmem:[%s3 + $0x15] sm:$0x1]
  %v838 = vld [vmem:[%s3 + $0x16] sm:$0x1]
  %v839 = vld [vmem:[%s3 + $0x17] sm:$0x1]
  %v840 = vpack.c.bf16 %v805, %v804
  %v841 = vperm.slane %v832, 0
  %v846 = vunpack.c.l.b16 %v807
  %v847 = vunpack.c.l.b16 %v808
  %v848 = vunpack.c.l.b16 %v809
  %v849 = vunpack.c.l.b16 %v810
  %v850 = vpack.c.b16 %v847, %v846
  %v851 = vpack.c.b16 %v849, %v848
  %v855 = vsel %vm69, %v840, 0
  %857 = vmatpush.bf16.msra.mxu0 0
  %858 = vmatpush.bf16.msra.mxu0 0
  %859 = vmatpush.bf16.msra.mxu0 0
  %860 = vmatpush.bf16.msra.mxu0 0
  %861 = vmatpush.bf16.msra.mxu0 0
  %862 = vmatpush.bf16.msra.mxu0 0
  %863 = vmatpush.bf16.msra.mxu0 %v851
  %864 = vmatpush.bf16.msra.mxu0 %v850
  %865 = vmatmul.bf16.gmra.mxu0 %v855
  %v866 = vpop.f32.mrf.mxu0
  %v867 = vadd.f32 %v841, %v866
  %v868 = vpop.f32.mrf.mxu0
  %v869 = vadd.f32 %v841, %v868
  %870 = vdwg.mxu0
  %v871 = vpack.c.bf16 %v867, %v867
  %v872 = vpack.c.bf16 %v869, %v869
  %v874 = vunpack.c.l.b16 %v871
  %v875 = vpack.c.b16 %v874, %v874
  %876 = vrot.lane.b32.xlu0 %v875, 96
  %v877 = vpop.permute.xlu0 %876
  %v879 = vsel %vm567, %v871, 0
  %v882 = vsel %vm567, %v877, 0
  %884 = vmatpush.bf16.xpose.msra.mxu0 0
  %885 = vmatpush.bf16.xpose.msra.mxu0 0
  %886 = vmatpush.bf16.xpose.msra.mxu0 0
  %887 = vmatpush.bf16.xpose.msra.mxu0 0
  %888 = vmatpush.bf16.xpose.msra.mxu0 0
  %889 = vmatpush.bf16.xpose.msra.mxu0 0
  %890 = vmatpush.bf16.xpose.msra.mxu0 0
  %891 = vmatpush.bf16.xpose.msra.mxu0 %v882
  %892 = vmatmul.bf16.gmra.mxu0 %v879
  %v893 = vpop.f32.mrf.mxu0
  %v894 = vadd.f32 0.0, %v893
  %v895 = vpop.f32.mrf.mxu0
  %896 = vdwg.mxu0
  %v898 = vunpack.c.l.b16 %v872
  %v899 = vpack.c.b16 %v898, %v898
  %900 = vrot.lane.b32.xlu0 %v899, 96
  %v901 = vpop.permute.xlu0 %900
  %v903 = vsel %vm567, %v872, 0
  %v906 = vsel %vm567, %v901, 0
  %908 = vmatpush.bf16.xpose.msra.mxu0 0
  %909 = vmatpush.bf16.xpose.msra.mxu0 0
  %910 = vmatpush.bf16.xpose.msra.mxu0 0
  %911 = vmatpush.bf16.xpose.msra.mxu0 0
  %912 = vmatpush.bf16.xpose.msra.mxu0 0
  %913 = vmatpush.bf16.xpose.msra.mxu0 0
  %914 = vmatpush.bf16.xpose.msra.mxu0 0
  %915 = vmatpush.bf16.xpose.msra.mxu0 %v906
  %916 = vmatmul.bf16.gmra.mxu0 %v903
  %v917 = vpop.f32.mrf.mxu0
  %v918 = vadd.f32 0.0, %v917
  %v919 = vpop.f32.mrf.mxu0
  %920 = vdwg.mxu0
  %v921 = vsel %vm94, %v894, -inf
  %922 = vmax.xlane.f32.xlu0 %v921
  %v923 = vpop.xlane.xlu0 %922
  %v924 = vsel %vm94, %v918, -inf
  %925 = vmax.xlane.f32.xlu0 %v924
  %v926 = vpop.xlane.xlu0 %925
  %v927 = vsub.f32 %v894, %v923
  %v928 = vsub.f32 %v918, %v926
  %v929 = vmul.f32 %v927, 1.442695
  %v930 = vpow.pop %v929
  %v931 = vmul.f32 %v928, 1.442695
  %v932 = vpow.pop %v931
  %v933 = vsel %vm94, %v930, 0.0
  %934 = vadd.xlane.f32.xlu0 %v933
  %v935 = vpop.xlane.xlu0 %934
  %v936 = vsel %vm94, %v932, 0.0
  %937 = vadd.xlane.f32.xlu0 %v936
  %v938 = vpop.xlane.xlu0 %937
  %v939 = vrcp.pop %v935
  %v940 = vrcp.pop %v938
  %v941 = vmul.f32 %v930, %v939
  %v942 = vmul.f32 %v932, %v940
  %v943 = vpack.c.bf16 %v941, %v941
  %v944 = vpack.c.bf16 %v942, %v942
  %945 = vrot.lane.b32.xlu0 %v875, 64
  %v946 = vpop.permute.xlu0 %945
  %v948 = vsel %vm94, %v943, 0
  %v951 = vsel %vm167, %v946, 0
  %953 = vmatpush.bf16.msra.mxu0 0
  %954 = vmatpush.bf16.msra.mxu0 0
  %955 = vmatpush.bf16.msra.mxu0 0
  %956 = vmatpush.bf16.msra.mxu0 0
  %957 = vmatpush.bf16.msra.mxu0 0
  %958 = vmatpush.bf16.msra.mxu0 0
  %959 = vmatpush.bf16.msra.mxu0 0
  %960 = vmatpush.bf16.msra.mxu0 %v951
  %961 = vmatmul.bf16.gmra.mxu0 %v948
  %v962 = vpop.f32.mrf.mxu0
  %v963 = vadd.f32 0.0, %v962
  %v964 = vpop.f32.mrf.mxu0
  %965 = vdwg.mxu0
  %966 = vrot.lane.b32.xlu0 %v899, 64
  %v967 = vpop.permute.xlu0 %966
  %v969 = vsel %vm94, %v944, 0
  %v972 = vsel %vm167, %v967, 0
  %974 = vmatpush.bf16.msra.mxu0 0
  %975 = vmatpush.bf16.msra.mxu0 0
  %976 = vmatpush.bf16.msra.mxu0 0
  %977 = vmatpush.bf16.msra.mxu0 0
  %978 = vmatpush.bf16.msra.mxu0 0
  %979 = vmatpush.bf16.msra.mxu0 0
  %980 = vmatpush.bf16.msra.mxu0 0
  %981 = vmatpush.bf16.msra.mxu0 %v972
  %982 = vmatmul.bf16.gmra.mxu0 %v969
  %v983 = vpop.f32.mrf.mxu0
  %v984 = vadd.f32 0.0, %v983
  %v985 = vpop.f32.mrf.mxu0
  %986 = vdwg.mxu0
  %987 = vrot.lane.b32.xlu0 %v875, 112
  %v988 = vpop.permute.xlu0 %987
  %989 = vrot.lane.b32.xlu0 %v875, 80
  %v990 = vpop.permute.xlu0 %989
  %v992 = vsel %vm567, %v988, 0
  %v995 = vsel %vm567, %v990, 0
  %997 = vmatpush.bf16.xpose.msra.mxu0 0
  %998 = vmatpush.bf16.xpose.msra.mxu0 0
  %999 = vmatpush.bf16.xpose.msra.mxu0 0
  %1000 = vmatpush.bf16.xpose.msra.mxu0 0
  %1001 = vmatpush.bf16.xpose.msra.mxu0 0
  %1002 = vmatpush.bf16.xpose.msra.mxu0 0
  %1003 = vmatpush.bf16.xpose.msra.mxu0 0
  %1004 = vmatpush.bf16.xpose.msra.mxu0 %v995
  %1005 = vmatmul.bf16.gmra.mxu0 %v992
  %v1006 = vpop.f32.mrf.mxu0
  %v1007 = vadd.f32 0.0, %v1006
  %v1008 = vpop.f32.mrf.mxu0
  %1009 = vdwg.mxu0
  %1010 = vrot.lane.b32.xlu0 %v899, 112
  %v1011 = vpop.permute.xlu0 %1010
  %1012 = vrot.lane.b32.xlu0 %v899, 80
  %v1013 = vpop.permute.xlu0 %1012
  %v1015 = vsel %vm567, %v1011, 0
  %v1018 = vsel %vm567, %v1013, 0
  %1020 = vmatpush.bf16.xpose.msra.mxu0 0
  %1021 = vmatpush.bf16.xpose.msra.mxu0 0
  %1022 = vmatpush.bf16.xpose.msra.mxu0 0
  %1023 = vmatpush.bf16.xpose.msra.mxu0 0
  %1024 = vmatpush.bf16.xpose.msra.mxu0 0
  %1025 = vmatpush.bf16.xpose.msra.mxu0 0
  %1026 = vmatpush.bf16.xpose.msra.mxu0 0
  %1027 = vmatpush.bf16.xpose.msra.mxu0 %v1018
  %1028 = vmatmul.bf16.gmra.mxu0 %v1015
  %v1029 = vpop.f32.mrf.mxu0
  %v1030 = vadd.f32 0.0, %v1029
  %v1031 = vpop.f32.mrf.mxu0
  %1032 = vdwg.mxu0
  %v1033 = vsel %vm94, %v1007, -inf
  %1034 = vmax.xlane.f32.xlu0 %v1033
  %v1035 = vpop.xlane.xlu0 %1034
  %v1036 = vsel %vm94, %v1030, -inf
  %1037 = vmax.xlane.f32.xlu0 %v1036
  %v1038 = vpop.xlane.xlu0 %1037
  %v1039 = vsub.f32 %v1007, %v1035
  %v1040 = vsub.f32 %v1030, %v1038
  %v1041 = vmul.f32 %v1039, 1.442695
  %v1042 = vpow.pop %v1041
  %v1043 = vmul.f32 %v1040, 1.442695
  %v1044 = vpow.pop %v1043
  %v1045 = vsel %vm94, %v1042, 0.0
  %1046 = vadd.xlane.f32.xlu0 %v1045
  %v1047 = vpop.xlane.xlu0 %1046
  %v1048 = vsel %vm94, %v1044, 0.0
  %1049 = vadd.xlane.f32.xlu0 %v1048
  %v1050 = vpop.xlane.xlu0 %1049
  %v1051 = vrcp.pop %v1047
  %v1052 = vrcp.pop %v1050
  %v1053 = vmul.f32 %v1042, %v1051
  %v1054 = vmul.f32 %v1044, %v1052
  %v1055 = vpack.c.bf16 %v1053, %v1053
  %v1056 = vpack.c.bf16 %v1054, %v1054
  %1057 = vrot.lane.b32.xlu0 %v875, 48
  %v1058 = vpop.permute.xlu0 %1057
  %v1060 = vsel %vm94, %v1055, 0
  %v1063 = vsel %vm167, %v1058, 0
  %1065 = vmatpush.bf16.msra.mxu0 0
  %1066 = vmatpush.bf16.msra.mxu0 0
  %1067 = vmatpush.bf16.msra.mxu0 0
  %1068 = vmatpush.bf16.msra.mxu0 0
  %1069 = vmatpush.bf16.msra.mxu0 0
  %1070 = vmatpush.bf16.msra.mxu0 0
  %1071 = vmatpush.bf16.msra.mxu0 0
  %1072 = vmatpush.bf16.msra.mxu0 %v1063
  %1073 = vmatmul.bf16.gmra.mxu0 %v1060
  %v1074 = vpop.f32.mrf.mxu0
  %v1075 = vadd.f32 0.0, %v1074
  %v1076 = vpop.f32.mrf.mxu0
  %1077 = vdwg.mxu0
  %1078 = vrot.lane.b32.xlu0 %v899, 48
  %v1079 = vpop.permute.xlu0 %1078
  %v1081 = vsel %vm94, %v1056, 0
  %v1084 = vsel %vm167, %v1079, 0
  %1086 = vmatpush.bf16.msra.mxu0 0
  %1087 = vmatpush.bf16.msra.mxu0 0
  %1088 = vmatpush.bf16.msra.mxu0 0
  %1089 = vmatpush.bf16.msra.mxu0 0
  %1090 = vmatpush.bf16.msra.mxu0 0
  %1091 = vmatpush.bf16.msra.mxu0 0
  %1092 = vmatpush.bf16.msra.mxu0 0
  %1093 = vmatpush.bf16.msra.mxu0 %v1084
  %1094 = vmatmul.bf16.gmra.mxu0 %v1081
  %v1095 = vpop.f32.mrf.mxu0
  %v1096 = vadd.f32 0.0, %v1095
  %v1097 = vpop.f32.mrf.mxu0
  %1098 = vdwg.mxu0
  %1101 = vrot.lane.b32.xlu0 %v1075, 16
  %v1102 = vpop.permute.xlu0 %1101
  %1103 = vrot.lane.b32.xlu0 %v1096, 16
  %v1104 = vpop.permute.xlu0 %1103
  %v1107 = vsel %vm567, %v963, %v1102
  %v1108 = vsel %vm567, %v984, %v1104
  %v1109 = vpack.c.bf16 %v1108, %v1107
  %v1110 = vperm.slane %v833, 0
  %1111 = vrot.lane.b32.xlu0 %v850, 32
  %v1112 = vpop.permute.xlu0 %1111
  %1113 = vrot.lane.b32.xlu0 %v851, 32
  %v1114 = vpop.permute.xlu0 %1113
  %v1118 = vsel %vm69, %v1109, 0
  %1120 = vmatpush.bf16.msra.mxu0 0
  %1121 = vmatpush.bf16.msra.mxu0 0
  %1122 = vmatpush.bf16.msra.mxu0 0
  %1123 = vmatpush.bf16.msra.mxu0 0
  %1124 = vmatpush.bf16.msra.mxu0 0
  %1125 = vmatpush.bf16.msra.mxu0 0
  %1126 = vmatpush.bf16.msra.mxu0 %v1114
  %1127 = vmatpush.bf16.msra.mxu0 %v1112
  %1128 = vmatmul.bf16.gmra.mxu0 %v1118
  %v1129 = vpop.f32.mrf.mxu0
  %v1130 = vadd.f32 %v1110, %v1129
  %v1131 = vpop.f32.mrf.mxu0
  %v1132 = vadd.f32 %v1110, %v1131
  %1133 = vdwg.mxu0
  %v1134 = vadd.f32 %v804, %v1130
  %v1135 = vadd.f32 %v805, %v1132
  %v1136 = vsel %vm69, %v1134, 0.0
  %1137 = vadd.xlane.f32.xlu0 %v1136
  %v1138 = vpop.xlane.xlu0 %1137
  %v1139 = vsel %vm69, %v1135, 0.0
  %1140 = vadd.xlane.f32.xlu0 %v1139
  %v1141 = vpop.xlane.xlu0 %1140
  %v1142 = vmul.f32 %v1138, %v612
  %v1143 = vmul.f32 %v1141, %v612
  %v1144 = vsub.f32 %v1134, %v1142
  %v1145 = vsub.f32 %v1135, %v1143
  %v1146 = vmul.f32 %v1144, %v1144
  %v1147 = vmul.f32 %v1145, %v1145
  %v1148 = vsel %vm69, %v1146, 0.0
  %1149 = vadd.xlane.f32.xlu0 %v1148
  %v1150 = vpop.xlane.xlu0 %1149
  %v1151 = vsel %vm69, %v1147, 0.0
  %1152 = vadd.xlane.f32.xlu0 %v1151
  %v1153 = vpop.xlane.xlu0 %1152
  %v1154 = vmul.f32 %v1150, %v612
  %v1155 = vmul.f32 %v1153, %v612
  %v1156 = vadd.f32 %v1154, 1e-05
  %v1157 = vadd.f32 %v1155, 1e-05
  %v1158 = vrsqrt.pop %v1156
  %v1159 = vmul.f32 %v1158, %v1156
  %v1160 = vmul.f32 %v1159, %v1158
  %v1161 = vmul.f32 0.5, %v1160
  %v1162 = vsub.f32 1.5, %v1161
  %v1163 = vmul.f32 %v1158, %v1162
  %vm1164 = vweird.f32 %v1156
  %vm1165 = vweird.f32 %v1158
  %vm1166 = vmor %vm1164, %vm1165
  %v1167 = vsel %vm1166, %v1158, %v1163
  %v1168 = vrsqrt.pop %v1157
  %v1169 = vmul.f32 %v1168, %v1157
  %v1170 = vmul.f32 %v1169, %v1168
  %v1171 = vmul.f32 0.5, %v1170
  %v1172 = vsub.f32 1.5, %v1171
  %v1173 = vmul.f32 %v1168, %v1172
  %vm1174 = vweird.f32 %v1157
  %vm1175 = vweird.f32 %v1168
  %vm1176 = vmor %vm1174, %vm1175
  %v1177 = vsel %vm1176, %v1168, %v1173
  %v1178 = vmul.f32 %v1144, %v1167
  %v1179 = vmul.f32 %v1145, %v1177
  %v1180 = vperm.slane %v834, 0
  %v1181 = vmul.f32 %v1178, %v1180
  %v1182 = vmul.f32 %v1179, %v1180
  %v1183 = vperm.slane %v835, 0
  %v1184 = vadd.f32 %v1181, %v1183
  %v1185 = vadd.f32 %v1182, %v1183
  %v1186 = vpack.c.bf16 %v1185, %v1184
  %v1187 = vperm.slane %v836, 0
  %v1192 = vunpack.c.l.b16 %v811
  %v1193 = vunpack.c.l.b16 %v812
  %v1194 = vunpack.c.l.b16 %v813
  %v1195 = vunpack.c.l.b16 %v814
  %v1196 = vpack.c.b16 %v1193, %v1192
  %v1197 = vpack.c.b16 %v1195, %v1194
  %v1201 = vsel %vm69, %v1186, 0
  %1203 = vmatpush.bf16.msra.mxu0 0
  %1204 = vmatpush.bf16.msra.mxu0 0
  %1205 = vmatpush.bf16.msra.mxu0 0
  %1206 = vmatpush.bf16.msra.mxu0 0
  %1207 = vmatpush.bf16.msra.mxu0 0
  %1208 = vmatpush.bf16.msra.mxu0 0
  %1209 = vmatpush.bf16.msra.mxu0 %v1197
  %1210 = vmatpush.bf16.msra.mxu0 %v1196
  %1211 = vmatmul.bf16.gmra.mxu0 %v1201
  %v1212 = vpop.f32.mrf.mxu0
  %v1213 = vadd.f32 %v1187, %v1212
  %v1214 = vpop.f32.mrf.mxu0
  %v1215 = vadd.f32 %v1187, %v1214
  %1216 = vdwg.mxu0
  %v1217 = vmax.f32 %v1213, 0.0
  %v1218 = vmax.f32 %v1215, 0.0
  %v1219 = vpack.c.bf16 %v1218, %v1217
  %v1220 = vperm.slane %v837, 0
  %v1237 = vunpack.c.l.b16 %v816
  %v1238 = vunpack.c.l.b16 %v817
  %v1239 = vunpack.c.l.b16 %v818
  %v1240 = vunpack.c.l.b16 %v819
  %v1241 = vunpack.c.l.b16 %v820
  %v1242 = vunpack.c.l.b16 %v821
  %v1243 = vunpack.c.l.b16 %v822
  %v1244 = vunpack.c.l.b16 %v823
  %v1245 = vunpack.c.l.b16 %v824
  %v1246 = vunpack.c.l.b16 %v825
  %v1247 = vunpack.c.l.b16 %v826
  %v1248 = vunpack.c.l.b16 %v827
  %v1249 = vunpack.c.l.b16 %v828
  %v1250 = vunpack.c.l.b16 %v829
  %v1251 = vunpack.c.l.b16 %v830
  %v1252 = vunpack.c.l.b16 %v831
  %v1253 = vpack.c.b16 %v1238, %v1237
  %v1254 = vpack.c.b16 %v1240, %v1239
  %v1255 = vpack.c.b16 %v1242, %v1241
  %v1256 = vpack.c.b16 %v1244, %v1243
  %v1257 = vpack.c.b16 %v1246, %v1245
  %v1258 = vpack.c.b16 %v1248, %v1247
  %v1259 = vpack.c.b16 %v1250, %v1249
  %v1260 = vpack.c.b16 %v1252, %v1251
  %1269 = vmatpush.bf16.msra.mxu0 %v1260
  %1270 = vmatpush.bf16.msra.mxu0 %v1259
  %1271 = vmatpush.bf16.msra.mxu0 %v1258
  %1272 = vmatpush.bf16.msra.mxu0 %v1257
  %1273 = vmatpush.bf16.msra.mxu0 %v1256
  %1274 = vmatpush.bf16.msra.mxu0 %v1255
  %1275 = vmatpush.bf16.msra.mxu0 %v1254
  %1276 = vmatpush.bf16.msra.mxu0 %v1253
  %1277 = vmatmul.bf16.gmra.mxu0 %v1219
  %v1278 = vpop.f32.mrf.mxu0
  %v1279 = vadd.f32 %v1220, %v1278
  %v1280 = vpop.f32.mrf.mxu0
  %v1281 = vadd.f32 %v1220, %v1280
  %1282 = vdwg.mxu0
  %v1283 = vadd.f32 %v1184, %v1279
  %v1284 = vadd.f32 %v1185, %v1281
  %v1285 = vsel %vm69, %v1283, 0.0
  %1286 = vadd.xlane.f32.xlu0 %v1285
  %v1287 = vpop.xlane.xlu0 %1286
  %v1288 = vsel %vm69, %v1284, 0.0
  %1289 = vadd.xlane.f32.xlu0 %v1288
  %v1290 = vpop.xlane.xlu0 %1289
  %v1291 = vmul.f32 %v1287, %v612
  %v1292 = vmul.f32 %v1290, %v612
  %v1293 = vsub.f32 %v1283, %v1291
  %v1294 = vsub.f32 %v1284, %v1292
  %v1295 = vmul.f32 %v1293, %v1293
  %v1296 = vmul.f32 %v1294, %v1294
  %v1297 = vsel %vm69, %v1295, 0.0
  %1298 = vadd.xlane.f32.xlu0 %v1297
  %v1299 = vpop.xlane.xlu0 %1298
  %v1300 = vsel %vm69, %v1296, 0.0
  %1301 = vadd.xlane.f32.xlu0 %v1300
  %v1302 = vpop.xlane.xlu0 %1301
  %v1303 = vmul.f32 %v1299, %v612
  %v1304 = vmul.f32 %v1302, %v612
  %v1305 = vadd.f32 %v1303, 1e-05
  %v1306 = vadd.f32 %v1304, 1e-05
  %v1307 = vrsqrt.pop %v1305
  %v1308 = vmul.f32 %v1307, %v1305
  %v1309 = vmul.f32 %v1308, %v1307
  %v1310 = vmul.f32 0.5, %v1309
  %v1311 = vsub.f32 1.5, %v1310
  %v1312 = vmul.f32 %v1307, %v1311
  %vm1313 = vweird.f32 %v1305
  %vm1314 = vweird.f32 %v1307
  %vm1315 = vmor %vm1313, %vm1314
  %v1316 = vsel %vm1315, %v1307, %v1312
  %v1317 = vrsqrt.pop %v1306
  %v1318 = vmul.f32 %v1317, %v1306
  %v1319 = vmul.f32 %v1318, %v1317
  %v1320 = vmul.f32 0.5, %v1319
  %v1321 = vsub.f32 1.5, %v1320
  %v1322 = vmul.f32 %v1317, %v1321
  %vm1323 = vweird.f32 %v1306
  %vm1324 = vweird.f32 %v1317
  %vm1325 = vmor %vm1323, %vm1324
  %v1326 = vsel %vm1325, %v1317, %v1322
  %v1327 = vmul.f32 %v1293, %v1316
  %v1328 = vmul.f32 %v1294, %v1326
  %v1329 = vperm.slane %v838, 0
  %v1330 = vmul.f32 %v1327, %v1329
  %v1331 = vmul.f32 %v1328, %v1329
  %v1332 = vperm.slane %v839, 0
  %v1333 = vadd.f32 %v1330, %v1332
  %v1334 = vadd.f32 %v1331, %v1332
  %v1335 = vsel %vm69, %v1333, 0.0
  %v1336 = vrot.slane %v1335, 4
  %v1337 = vadd.f32 %v1335, %v1336
  %v1338 = vrot.slane %v1337, 2
  %v1339 = vadd.f32 %v1337, %v1338
  %v1340 = vrot.slane %v1339, 1
  %v1341 = vadd.f32 %v1339, %v1340
  %v1342 = vsel %vm69, %v1334, 0.0
  %v1343 = vrot.slane %v1342, 4
  %v1344 = vadd.f32 %v1342, %v1343
  %v1345 = vrot.slane %v1344, 2
  %v1346 = vadd.f32 %v1344, %v1345
  %v1347 = vrot.slane %v1346, 1
  %v1348 = vadd.f32 %v1346, %v1347
  %v1349 = vld [vmem:[%s3 + $0x18] sm:$0x1]
  %v1350 = vld [vmem:[%s3 + $0x19] sm:$0x1]
  %v1351 = vperm.slane %v1349, 0
  %v1352 = vmul.f32 %v1341, %v1351
  %v1353 = vmul.f32 %v1348, %v1351
  %v1356 = vrot.slane %v1353, 7
  %vm1357 = vcmask 1041409
  %v1358 = vsel %vm1357, %v1356, %v1352
  %vm1360 = vcmask 254976
  %v1361 = vsel %vm1360, %v1358, 0.0
  %1362 = vadd.xlane.f32.xlu0 %v1361
  %v1363 = vpop.xlane.xlu0 %1362
  %v1364 = vperm.slane %v1350, 0
  %v1365 = vadd.f32 %v1363, %v1364
  %vm1366 = vcmask 1024
  %1367 = vst.msk [vmem:[%s4] sm:$0x3] %vm1366, %v1365
  // Predicated region
  $region18: #{forward.1} parent=0 // pred_check
    _
  $region19: #{forward.1} parent=0 // pred_check_branch
    %1369 = sbr.rel (0) target = $region21
  $region20: #{forward.1} parent=0 // pred_region
    _
  $region21: #{forward.1} parent=0 // pred_fallthru
    _
  // Predicated region
  $region22: #{forward.1} parent=0 // pred_check
    _
  $region23: #{forward.1} parent=0 // pred_check_branch
    %1371 = sbr.rel (0) target = $region25
  $region24: #{forward.1} parent=0 // pred_region
    _
  $region25: #{forward.1} parent=0 // pred_fallthru
    _

</llo_original>
